<compile_context>
chip_gen: v7x
topology: tpu7x:2x2x1
jax: 0.10.0
libtpu: 0.0.40
codegen_flags: <defaults>
</compile_context>

<pallas_src>
import functools
import math

import jax
import jax.numpy as jnp
from jax.experimental import pallas as pl
from jax.experimental.pallas import tpu as pltpu

# ---- small, deterministic config ----
N_LAYERS = 4        # config.n_layers
N_HEADS = 4         # config.n_heads
DIM = 32            # config.dim == config.hidden_size
HIDDEN_DIM = 64     # config.hidden_dim (FFN inner size)
LINEAR_SIZE = 32    # Transformer.linear_size
EPS = 1e-12         # LayerNorm eps

HEAD_DIM = DIM // N_HEADS
VEC_ROWS = 8                       # rows in the packed bias/LN slab (7 used + pad)
VEC_WIDTH = max(DIM, HIDDEN_DIM)   # lane width of the packed bias/LN slab
SEQ_PAD = 8                        # pad kept-token counts to a multiple of this
NEG_INF = -1e9                     # finite mask value; exp underflows to exactly 0


# --------------------------- in-kernel helpers ---------------------------

def _gelu(x):
    # exact (erf-based) gelu, matching transformers' `gelu`
    # (a tanh-approx gelu would move work VALU->EUP on v5e but changes numerics)
    return 0.5 * x * (1.0 + jax.lax.erf(x / math.sqrt(2.0)))


def _sigmoid(x):
    # 1/(1+exp(-x)) with both exp and the reciprocal on the EUP slot.
    return pl.reciprocal(1.0 + jnp.exp(-x), approx=True)


def _layer_norm(x, gamma, beta):
    mu = jnp.mean(x, axis=-1, keepdims=True)
    var = jnp.mean(jnp.square(x - mu), axis=-1, keepdims=True)
    return (x - mu) * jax.lax.rsqrt(var + EPS) * gamma + beta


# --------------------------- Pallas kernel ---------------------------

def _blocks_kernel(x_ref, kok_ref, qid_ref, kid_ref,
                   wqkv_ref, bqkv_ref, wo_ref, w1_ref, w2_ref, vec_ref,
                   sw1_ref, svec_ref,
                   o_ref, p_ref,
                   *, n_heads, dim, hidden_dim, linear_size):
    """One grid step == one TransformerBlock applied to the whole flattened batch.

    The hidden state is carried in the OUTPUT block (constant index map -> stays
    resident in VMEM across the layer axis, written back to HBM once).  On the
    last layer of the group the token-selection MLP is fused in and emitted as a
    lane-dense (1, N) probability row.
    """
    l = pl.program_id(0)
    last = pl.num_programs(0) - 1

    @pl.when(l == 0)
    def _():
        o_ref[...] = x_ref[...]

    h = o_ref[...]                                  # (N, D) f32, N = bs * S_pad

    D = dim
    F = hidden_dim
    nh = n_heads
    dh = D // nh
    N = h.shape[0]
    scale = 1.0 / math.sqrt(dh)

    vecs = vec_ref[0]                               # (8, VEC_WIDTH)
    bo = vecs[0:1, :D]
    g1 = vecs[1:2, :D]
    be1 = vecs[2:3, :D]
    b1 = vecs[3:4, :F]
    b2 = vecs[4:5, :D]
    g2 = vecs[5:6, :D]
    be2 = vecs[6:7, :D]

    # Block-diagonal key mask rebuilt in-kernel from O(N) operands:
    # query batch-id column vs (masked) key batch-id row.
    allowed = qid_ref[...] == kid_ref[...]          # (N, 1) == (1, N) -> (N, N)

    # ---- fused QKV projection: ONE (N, D) @ (D, 3D) MXU op ----
    qkv = jnp.dot(h, wqkv_ref[0], preferred_element_type=jnp.float32) \
        + bqkv_ref[0]                               # (N, 3D)
    q2d = qkv[:, 0:D] * scale
    k2d = qkv[:, D:2 * D]
    v2d = qkv[:, 2 * D:3 * D]

    # Per-head attention (scores / softmax / context are intrinsically per-head;
    # same MXU push count as a batched einsum).  Heads stay on lanes so the
    # context re-assembles with a simple lane concat (torch `unshape` order).
    ctx_heads = []
    for h0 in range(nh):
        sl_h = slice(h0 * dh, (h0 + 1) * dh)
        s = jnp.einsum('qd,kd->qk', q2d[:, sl_h], k2d[:, sl_h],
                       preferred_element_type=jnp.float32)            # (N, N)
        s = jnp.where(allowed, s, NEG_INF)
        s_max = jnp.max(s, axis=-1, keepdims=True)
        e = jnp.exp(s - s_max)
        p_attn = e * pl.reciprocal(jnp.sum(e, axis=-1, keepdims=True),
                                   approx=True)                       # softmax(-1)
        ctx_heads.append(jnp.dot(p_attn, v2d[:, sl_h],
                                 preferred_element_type=jnp.float32))  # (N, dh)
    ctx2d = jnp.concatenate(ctx_heads, axis=1)                         # (N, D)

    # ---- fused output projection: ONE (N, D) @ (D, D) MXU op ----
    sa = jnp.dot(ctx2d, wo_ref[0], preferred_element_type=jnp.float32) + bo
    sa = _layer_norm(sa + h, g1, be1)                                  # sa_layer_norm

    # ---- FFN ----
    f = _gelu(jnp.dot(sa, w1_ref[0], preferred_element_type=jnp.float32) + b1)
    f = jnp.dot(f, w2_ref[0], preferred_element_type=jnp.float32) + b2
    out = _layer_norm(f + sa, g2, be2)                                 # output_layer_norm

    o_ref[...] = out.astype(o_ref.dtype)            # layer carry (VMEM resident)

    # ---- token-selection MLP fused into the last layer of the group ----
    @pl.when(l == last)
    def _():
        svec = svec_ref[...]                        # (8, VEC_WIDTH)
        sb1 = svec[0:1, :linear_size]               # linear_1 bias  (1, LS)
        sw2 = svec[1:2, :linear_size]               # linear_2 weight row (1, LS)
        sb2 = svec[2:3, 0:1]                        # linear_2 bias  (1, 1)
        h1 = _gelu(jnp.dot(out, sw1_ref[...],
                           preferred_element_type=jnp.float32) + sb1)  # (N, LS)
        logits = jnp.dot(sw2, h1.T,
                         preferred_element_type=jnp.float32) + sb2     # (1, N)
        p_ref[...] = (_sigmoid(logits) * kok_ref[...]).astype(p_ref.dtype)


# --------------------------- weight packing (hoisted, once) ---------------------------

def pack_block_params(params):
    """Stack per-layer TransformerBlock weights into layer-indexed fused slabs."""
    D, F = DIM, HIDDEN_DIM

    def pad_vec(v):
        return jnp.pad(v.astype(jnp.float32), (0, VEC_WIDTH - v.shape[0]))

    wqkv, bqkv, wo, w1, w2, vecs = [], [], [], [], [], []
    for lp in params['layers']:
        # torch Linear: y = x @ W.T + b; columns of W.T are head-major output feats.
        wqkv.append(jnp.concatenate([lp['wq'].T, lp['wk'].T, lp['wv'].T], axis=1))  # (D, 3D)
        bqkv.append(jnp.concatenate([lp['bq'], lp['bk'], lp['bv']]).reshape(1, 3 * D))
        wo.append(lp['wo'].T)                                                        # (D, D)
        w1.append(lp['w_ff1'].T)                                                     # (D, F)
        w2.append(lp['w_ff2'].T)                                                     # (F, D)
        vecs.append(jnp.stack(
            [pad_vec(lp['bo']), pad_vec(lp['ln1_g']), pad_vec(lp['ln1_b']),
             pad_vec(lp['b_ff1']), pad_vec(lp['b_ff2']),
             pad_vec(lp['ln2_g']), pad_vec(lp['ln2_b']),
             jnp.zeros((VEC_WIDTH,), jnp.float32)], axis=0))                         # (8, 64)

    stack = lambda xs: jnp.stack(xs, axis=0)
    return {'wqkv': stack(wqkv), 'bqkv': stack(bqkv), 'wo': stack(wo),
            'w1': stack(w1), 'w2': stack(w2), 'vecs': stack(vecs)}


def pack_select_params(params):
    """Pack each select head (linear_1, linear_2) into one weight + one small slab."""
    sel = []
    for w in range(len(params['linear_1'])):
        w1 = params['linear_1'][w]['w'].T.astype(jnp.float32)       # (D, LS)
        b1 = params['linear_1'][w]['b'].astype(jnp.float32)         # (LS,)
        w2row = params['linear_2'][w]['w'].reshape(-1).astype(jnp.float32)  # (LS,)
        b2 = params['linear_2'][w]['b'].reshape(-1).astype(jnp.float32)     # (1,)
        vec = jnp.zeros((VEC_ROWS, VEC_WIDTH), jnp.float32)
        vec = vec.at[0, :LINEAR_SIZE].set(b1)
        vec = vec.at[1, :LINEAR_SIZE].set(w2row)
        vec = vec.at[2, 0].set(b2[0])
        sel.append({'w1': w1, 'vec': vec})
    return sel


def prepare_params(params):
    """Hoisted out of the forward: pack / stack all weights exactly once."""
    return {'blocks': pack_block_params(params), 'select': pack_select_params(params)}


# --------------------------- wrappers ---------------------------

def transformer_blocks_pallas(hidden, seq_mask, packed, sel_w1, sel_vec,
                              start, count):
    """Run `count` consecutive TransformerBlocks (layers start..start+count-1)
    and emit the fused token-selection probability row for the group output."""
    bs, S, D = hidden.shape
    N = bs * S
    x2 = hidden.reshape(N, D).astype(jnp.float32)
    mask_row = seq_mask.reshape(1, N).astype(jnp.float32)

    # O(N) mask operands instead of a dense (N, N) bias:
    batch_id = jnp.repeat(jnp.arange(bs, dtype=jnp.float32), S)      # (N,)
    qid = batch_id.reshape(N, 1)                                     # query batch id
    kid = jnp.where(mask_row > 0.5, batch_id.reshape(1, N), -1.0)    # masked key id

    kernel = functools.partial(_blocks_kernel, n_heads=N_HEADS, dim=D,
                               hidden_dim=HIDDEN_DIM, linear_size=LINEAR_SIZE)

    layer_map = lambda l, s=start: (s + l, 0, 0)   # pick layers via index_map offset
    const2 = lambda l: (0, 0)

    out, prob = pl.pallas_call(
        kernel,
        out_shape=(jax.ShapeDtypeStruct((N, D), jnp.float32),
                   jax.ShapeDtypeStruct((1, N), jnp.float32)),
        grid=(count,),
        in_specs=[
            pl.BlockSpec((N, D), const2),                              # x
            pl.BlockSpec((1, N), const2),                              # seq-mask row
            pl.BlockSpec((N, 1), const2),                              # query batch id
            pl.BlockSpec((1, N), const2),                              # masked key id
            pl.BlockSpec((1, D, 3 * D), layer_map),                    # fused Wqkv
            pl.BlockSpec((1, 1, 3 * D), layer_map),                    # fused bqkv
            pl.BlockSpec((1, D, D), layer_map),                        # Wo
            pl.BlockSpec((1, D, HIDDEN_DIM), layer_map),               # FFN W1
            pl.BlockSpec((1, HIDDEN_DIM, D), layer_map),               # FFN W2
            pl.BlockSpec((1, VEC_ROWS, VEC_WIDTH), layer_map),         # bias/LN slab
            pl.BlockSpec((D, LINEAR_SIZE), const2),                    # select W1
            pl.BlockSpec((VEC_ROWS, VEC_WIDTH), const2),               # select slab
        ],
        out_specs=(pl.BlockSpec((N, D), const2),                       # hidden carry
                   pl.BlockSpec((1, N), const2)),                      # select prob
        compiler_params=pltpu.CompilerParams(
            dimension_semantics=("arbitrary",)),
    )(x2, mask_row, qid, kid,
      packed['wqkv'], packed['bqkv'], packed['wo'],
      packed['w1'], packed['w2'], packed['vecs'],
      sel_w1, sel_vec)
    return out.reshape(bs, S, D), prob.reshape(bs, S)


def _pad_seq(hidden, seq_mask, multiple=SEQ_PAD):
    """Pad the token axis up to a multiple of `multiple` with zero rows / zero mask.
    Padded rows never influence real rows (key mask 0) and are sliced off at the end."""
    bs, s, _ = hidden.shape
    s_pad = max(multiple, ((s + multiple - 1) // multiple) * multiple)
    if s_pad == s:
        return hidden, seq_mask
    hidden = jnp.pad(hidden, ((0, 0), (0, s_pad - s), (0, 0)))
    seq_mask = jnp.pad(seq_mask, ((0, 0), (0, s_pad - s)))
    return hidden, seq_mask


# --------------------------- parameters ---------------------------

def _linear_init(key, out_f, in_f):
    k1, k2 = jax.random.split(key)
    return {'w': jax.random.normal(k1, (out_f, in_f), jnp.float32) * 0.05,
            'b': jax.random.normal(k2, (out_f,), jnp.float32) * 0.05}


def init_params(key):
    # The reference module builds ONE TransformerBlock and deepcopies it, so all
    # layers share identical initial weights; we mimic that.
    key, kq, kk, kv, ko, kf1, kf2 = jax.random.split(key, 7)
    q = _linear_init(kq, DIM, DIM)
    k_ = _linear_init(kk, DIM, DIM)
    v = _linear_init(kv, DIM, DIM)
    o = _linear_init(ko, DIM, DIM)
    f1 = _linear_init(kf1, HIDDEN_DIM, DIM)
    f2 = _linear_init(kf2, DIM, HIDDEN_DIM)
    block = {
        'wq': q['w'], 'bq': q['b'], 'wk': k_['w'], 'bk': k_['b'],
        'wv': v['w'], 'bv': v['b'], 'wo': o['w'], 'bo': o['b'],
        'ln1_g': jnp.ones((DIM,), jnp.float32), 'ln1_b': jnp.zeros((DIM,), jnp.float32),
        'w_ff1': f1['w'], 'b_ff1': f1['b'],
        'w_ff2': f2['w'], 'b_ff2': f2['b'],
        'ln2_g': jnp.ones((DIM,), jnp.float32), 'ln2_b': jnp.zeros((DIM,), jnp.float32),
    }
    params = {'layers': [block for _ in range(N_LAYERS)],
              'linear_1': [], 'linear_2': []}
    for _ in range(2):
        key, k1, k2 = jax.random.split(key, 3)
        params['linear_1'].append(_linear_init(k1, LINEAR_SIZE, DIM))
        params['linear_2'].append(_linear_init(k2, 1, LINEAR_SIZE))
    return params


# --------------------------- Transformer.forward ---------------------------

def transformer_forward(prepared, x, attn_mask, head_mask=None,
                        copy_rate=None, tokens_prob=None):
    # TODO(synk): copy_rate / tokens_prob guided-copy branch (Bernoulli sampling,
    #   zoom-matrix scatter, select_loss) not implemented; copy_rate=None path only.
    assert copy_rate is None
    # TODO(synk): per-layer head_mask scaling of attention weights not implemented;
    #   the path exercised here uses head_mask=None for every layer.
    packed = prepared['blocks']
    sel = prepared['select']

    bs, ori_num_items, dim = x.shape
    seq_mask = attn_mask.astype(jnp.float32)
    cur_len = ori_num_items                        # true (unpadded) kept length
    hidden, seq_mask = _pad_seq(x.astype(jnp.float32), seq_mask)

    Ls = []
    tot_select_loss = 0
    w = 0
    mini = 1
    prune_points = {1, N_LAYERS // 2}

    i = 0
    prob = None
    while i < N_LAYERS:
        if i in prune_points and cur_len > mini:
            # `prob` was produced (fused, select head `w`) by the previous block
            # group on exactly the hidden state the reference would score here.
            caiyang_prob = prob.at[:, 0].set(3.0)
            selected_token = (caiyang_prob >= 0.5).astype(seq_mask.dtype) * seq_mask
            l = jnp.sum(selected_token, axis=-1)
            Ls.append(l / ori_num_items)
            # Mirrors the reference's `int(torch.max(l).item())`: a host sync and a
            # data-dependent kept-token count (required for exact semantics).  The
            # SEQ_PAD padding keeps the Pallas kernel shapes fixed across prunes.
            num_items_to_keep = int(jnp.max(l))
            _, top_indices = jax.lax.top_k(caiyang_prob, num_items_to_keep)
            seq_mask = jnp.take_along_axis(seq_mask, top_indices, axis=1)
            hidden = jnp.take_along_axis(hidden, top_indices[:, :, None], axis=1)
            cur_len = num_items_to_keep
            hidden, seq_mask = _pad_seq(hidden, seq_mask)
            w += 1
        # fuse all consecutive layers up to (excluding) the next prune trigger
        j = i + 1
        while j < N_LAYERS and not (j in prune_points and cur_len > mini):
            j += 1
        sw = sel[min(w, len(sel) - 1)]
        hidden, prob = transformer_blocks_pallas(hidden, seq_mask, packed,
                                                 sw['w1'], sw['vec'], i, j - i)
        i = j

    return hidden[:, :cur_len, :], tot_select_loss, Ls


if __name__ == "__main__":
    key = jax.random.PRNGKey(0)
    kx, kp = jax.random.split(key)
    bs, seq = 2, 8
    x = jax.random.normal(kx, (bs, seq, DIM), dtype=jnp.float32)
    attn_mask = jnp.ones((bs, seq), dtype=jnp.int32).at[1, -2:].set(0)  # some padding
    params = init_params(kp)
    prepared = prepare_params(params)     # weight packing hoisted out of the forward

    hidden, tot_select_loss, Ls = transformer_forward(prepared, x, attn_mask)
    jax.block_until_ready(hidden)
    print("KERNEL_OK")
</pallas_src>

<mosaic_0001>
module attributes {stable_mosaic.version = 11 : i64} {
  func.func @_blocks_kernel(%arg0: i32, %arg1: memref<16x32xf32, #tpu.memory_space<vmem>>, %arg2: memref<1x16xf32, #tpu.memory_space<vmem>>, %arg3: memref<16x1xf32, #tpu.memory_space<vmem>>, %arg4: memref<1x16xf32, #tpu.memory_space<vmem>>, %arg5: memref<1x32x96xf32, #tpu.memory_space<vmem>>, %arg6: memref<1x1x96xf32, #tpu.memory_space<vmem>>, %arg7: memref<1x32x32xf32, #tpu.memory_space<vmem>>, %arg8: memref<1x32x64xf32, #tpu.memory_space<vmem>>, %arg9: memref<1x64x32xf32, #tpu.memory_space<vmem>>, %arg10: memref<1x8x64xf32, #tpu.memory_space<vmem>>, %arg11: memref<32x32xf32, #tpu.memory_space<vmem>>, %arg12: memref<8x64xf32, #tpu.memory_space<vmem>>, %arg13: memref<16x32xf32, #tpu.memory_space<vmem>>, %arg14: memref<1x16xf32, #tpu.memory_space<vmem>>) attributes {dimension_semantics = [#tpu.dimension_semantics<arbitrary>], iteration_bounds = array<i64: 1>, scalar_prefetch = 0 : i64, scratch_operands = 0 : i64, tpu.core_type = #tpu.core_type<tc>, window_params = [{pipeline_mode = #tpu.pipeline_mode<synchronous>, transform_indices = @transform_0, window_bounds = array<i64: 16, 32>}, {pipeline_mode = #tpu.pipeline_mode<synchronous>, transform_indices = @transform_1, window_bounds = array<i64: 1, 16>}, {pipeline_mode = #tpu.pipeline_mode<synchronous>, transform_indices = @transform_2, window_bounds = array<i64: 16, 1>}, {pipeline_mode = #tpu.pipeline_mode<synchronous>, transform_indices = @transform_3, window_bounds = array<i64: 1, 16>}, {transform_indices = @transform_4, window_bounds = array<i64: 1, 32, 96>}, {transform_indices = @transform_5, window_bounds = array<i64: 1, 1, 96>}, {transform_indices = @transform_6, window_bounds = array<i64: 1, 32, 32>}, {transform_indices = @transform_7, window_bounds = array<i64: 1, 32, 64>}, {transform_indices = @transform_8, window_bounds = array<i64: 1, 64, 32>}, {transform_indices = @transform_9, window_bounds = array<i64: 1, 8, 64>}, {pipeline_mode = #tpu.pipeline_mode<synchronous>, transform_indices = @transform_10, window_bounds = array<i64: 32, 32>}, {pipeline_mode = #tpu.pipeline_mode<synchronous>, transform_indices = @transform_11, window_bounds = array<i64: 8, 64>}, {pipeline_mode = #tpu.pipeline_mode<synchronous>, transform_indices = @transform_12, window_bounds = array<i64: 16, 32>}, {pipeline_mode = #tpu.pipeline_mode<synchronous>, transform_indices = @transform_13, window_bounds = array<i64: 1, 16>}]} {
    %c0_i32 = arith.constant 0 : i32
    %0 = arith.cmpi eq, %arg0, %c0_i32 : i32
    %1 = arith.extui %0 : i1 to i32
    %c0_i32_0 = arith.constant 0 : i32
    %2 = arith.cmpi ne, %1, %c0_i32_0 : i32
    scf.if %2 {
      %c0_65 = arith.constant 0 : index
      %c0_66 = arith.constant 0 : index
      %172 = vector.load %arg1[%c0_65, %c0_66] : memref<16x32xf32, #tpu.memory_space<vmem>>, vector<16x32xf32>
      %c0_67 = arith.constant 0 : index
      %c0_68 = arith.constant 0 : index
      %173 = vector.load %arg13[%c0_67, %c0_68] : memref<16x32xf32, #tpu.memory_space<vmem>>, vector<16x32xf32>
      tpu.vector_store %arg13[%c0_67, %c0_68], %172 {strides = array<i32>} : memref<16x32xf32, #tpu.memory_space<vmem>>, vector<16x32xf32>,
    } else {
    }
    %c0 = arith.constant 0 : index
    %c0_1 = arith.constant 0 : index
    %3 = vector.load %arg13[%c0, %c0_1] : memref<16x32xf32, #tpu.memory_space<vmem>>, vector<16x32xf32>
    %c0_2 = arith.constant 0 : index
    %c0_3 = arith.constant 0 : index
    %c0_4 = arith.constant 0 : index
    %4 = vector.load %arg10[%c0_2, %c0_3, %c0_4] : memref<1x8x64xf32, #tpu.memory_space<vmem>>, vector<1x8x64xf32>
    %5 = vector.shape_cast %4 : vector<1x8x64xf32> to vector<8x64xf32>
    %6 = vector.extract_strided_slice %5 {offsets = [0, 0], sizes = [1, 32], strides = [1, 1]} : vector<8x64xf32> to vector<1x32xf32>
    %7 = vector.extract_strided_slice %5 {offsets = [1, 0], sizes = [1, 32], strides = [1, 1]} : vector<8x64xf32> to vector<1x32xf32>
    %8 = vector.extract_strided_slice %5 {offsets = [2, 0], sizes = [1, 32], strides = [1, 1]} : vector<8x64xf32> to vector<1x32xf32>
    %9 = vector.extract_strided_slice %5 {offsets = [3, 0], sizes = [1, 64], strides = [1, 1]} : vector<8x64xf32> to vector<1x64xf32>
    %10 = vector.extract_strided_slice %5 {offsets = [4, 0], sizes = [1, 32], strides = [1, 1]} : vector<8x64xf32> to vector<1x32xf32>
    %11 = vector.extract_strided_slice %5 {offsets = [5, 0], sizes = [1, 32], strides = [1, 1]} : vector<8x64xf32> to vector<1x32xf32>
    %12 = vector.extract_strided_slice %5 {offsets = [6, 0], sizes = [1, 32], strides = [1, 1]} : vector<8x64xf32> to vector<1x32xf32>
    %c0_5 = arith.constant 0 : index
    %c0_6 = arith.constant 0 : index
    %13 = vector.load %arg3[%c0_5, %c0_6] : memref<16x1xf32, #tpu.memory_space<vmem>>, vector<16x1xf32>
    %c0_7 = arith.constant 0 : index
    %c0_8 = arith.constant 0 : index
    %14 = vector.load %arg4[%c0_7, %c0_8] : memref<1x16xf32, #tpu.memory_space<vmem>>, vector<1x16xf32>
    %15 = vector.broadcast %13 : vector<16x1xf32> to vector<16x16xf32>
    %16 = vector.broadcast %14 : vector<1x16xf32> to vector<16x16xf32>
    %17 = arith.cmpf oeq, %15, %16 : vector<16x16xf32>
    %c0_9 = arith.constant 0 : index
    %c0_10 = arith.constant 0 : index
    %c0_11 = arith.constant 0 : index
    %18 = vector.load %arg5[%c0_9, %c0_10, %c0_11] : memref<1x32x96xf32, #tpu.memory_space<vmem>>, vector<1x32x96xf32>
    %19 = vector.shape_cast %18 : vector<1x32x96xf32> to vector<32x96xf32>
    %cst = arith.constant dense<0.000000e+00> : vector<16x96xf32>
    %20 = tpu.matmul %3, %19, %cst {dimension_numbers = #tpu.dot_dimension_numbers<[1], [0], [0], [1], [0, 0, 1, 1], [], []>} : vector<16x32xf32>, vector<32x96xf32>, vector<16x96xf32> -> vector<16x96xf32>
    %c0_12 = arith.constant 0 : index
    %c0_13 = arith.constant 0 : index
    %c0_14 = arith.constant 0 : index
    %21 = vector.load %arg6[%c0_12, %c0_13, %c0_14] : memref<1x1x96xf32, #tpu.memory_space<vmem>>, vector<1x1x96xf32>
    %22 = vector.shape_cast %21 : vector<1x1x96xf32> to vector<1x96xf32>
    %23 = vector.broadcast %22 : vector<1x96xf32> to vector<16x96xf32>
    %24 = arith.addf %20, %23 : vector<16x96xf32>
    %25 = vector.extract_strided_slice %24 {offsets = [0, 0], sizes = [16, 32], strides = [1, 1]} : vector<16x96xf32> to vector<16x32xf32>
    %cst_15 = arith.constant 0.353553385 : f32
    %26 = vector.broadcast %cst_15 : f32 to vector<16x32xf32>
    %27 = arith.mulf %25, %26 : vector<16x32xf32>
    %28 = vector.extract_strided_slice %24 {offsets = [0, 32], sizes = [16, 32], strides = [1, 1]} : vector<16x96xf32> to vector<16x32xf32>
    %29 = vector.extract_strided_slice %24 {offsets = [0, 64], sizes = [16, 32], strides = [1, 1]} : vector<16x96xf32> to vector<16x32xf32>
    %30 = vector.extract_strided_slice %27 {offsets = [0, 0], sizes = [16, 8], strides = [1, 1]} : vector<16x32xf32> to vector<16x8xf32>
    %31 = vector.extract_strided_slice %28 {offsets = [0, 0], sizes = [16, 8], strides = [1, 1]} : vector<16x32xf32> to vector<16x8xf32>
    "tpu.trace_start"() <{level = 10 : i32, message = "qd,kd->qk"}> : () -> ()
    %cst_16 = arith.constant dense<0.000000e+00> : vector<16x16xf32>
    %32 = tpu.matmul %30, %31, %cst_16 {dimension_numbers = #tpu.dot_dimension_numbers<[1], [1], [0], [0], [0, 0, 1, 0], [], []>} : vector<16x8xf32>, vector<16x8xf32>, vector<16x16xf32> -> vector<16x16xf32>
    %cst_17 = arith.constant -1.000000e+09 : f32
    "tpu.trace_stop"() : () -> ()
    %33 = vector.broadcast %cst_17 : f32 to vector<16x16xf32>
    %34 = arith.select %17, %32, %33 : vector<16x16xi1>, vector<16x16xf32>
    %cst_18 = arith.constant dense<0xFF800000> : vector<16xf32>
    %35 = vector.multi_reduction <maximumf>, %34, %cst_18 [1] : vector<16x16xf32> to vector<16xf32>
    %36 = vector.shape_cast %35 : vector<16xf32> to vector<16x1xf32>
    %37 = vector.broadcast %36 : vector<16x1xf32> to vector<16x16xf32>
    %38 = arith.subf %34, %37 : vector<16x16xf32>
    %39 = math.exp %38 : vector<16x16xf32>
    %cst_19 = arith.constant dense<0.000000e+00> : vector<16xf32>
    %40 = vector.multi_reduction <add>, %39, %cst_19 [1] : vector<16x16xf32> to vector<16xf32>
    %41 = vector.shape_cast %40 : vector<16xf32> to vector<16x1xf32>
    %42 = tpu.reciprocal %41 {approx = true} : vector<16x1xf32> -> vector<16x1xf32>
    %43 = vector.broadcast %42 : vector<16x1xf32> to vector<16x16xf32>
    %44 = arith.mulf %39, %43 : vector<16x16xf32>
    %45 = vector.extract_strided_slice %29 {offsets = [0, 0], sizes = [16, 8], strides = [1, 1]} : vector<16x32xf32> to vector<16x8xf32>
    %cst_20 = arith.constant dense<0.000000e+00> : vector<16x8xf32>
    %46 = tpu.matmul %44, %45, %cst_20 {dimension_numbers = #tpu.dot_dimension_numbers<[1], [0], [0], [1], [0, 0, 1, 1], [], []>} : vector<16x16xf32>, vector<16x8xf32>, vector<16x8xf32> -> vector<16x8xf32>
    %47 = vector.extract_strided_slice %27 {offsets = [0, 8], sizes = [16, 8], strides = [1, 1]} : vector<16x32xf32> to vector<16x8xf32>
    %48 = vector.extract_strided_slice %28 {offsets = [0, 8], sizes = [16, 8], strides = [1, 1]} : vector<16x32xf32> to vector<16x8xf32>
    "tpu.trace_start"() <{level = 10 : i32, message = "qd,kd->qk"}> : () -> ()
    %cst_21 = arith.constant dense<0.000000e+00> : vector<16x16xf32>
    %49 = tpu.matmul %47, %48, %cst_21 {dimension_numbers = #tpu.dot_dimension_numbers<[1], [1], [0], [0], [0, 0, 1, 0], [], []>} : vector<16x8xf32>, vector<16x8xf32>, vector<16x16xf32> -> vector<16x16xf32>
    %cst_22 = arith.constant -1.000000e+09 : f32
    "tpu.trace_stop"() : () -> ()
    %50 = vector.broadcast %cst_22 : f32 to vector<16x16xf32>
    %51 = arith.select %17, %49, %50 : vector<16x16xi1>, vector<16x16xf32>
    %cst_23 = arith.constant dense<0xFF800000> : vector<16xf32>
    %52 = vector.multi_reduction <maximumf>, %51, %cst_23 [1] : vector<16x16xf32> to vector<16xf32>
    %53 = vector.shape_cast %52 : vector<16xf32> to vector<16x1xf32>
    %54 = vector.broadcast %53 : vector<16x1xf32> to vector<16x16xf32>
    %55 = arith.subf %51, %54 : vector<16x16xf32>
    %56 = math.exp %55 : vector<16x16xf32>
    %cst_24 = arith.constant dense<0.000000e+00> : vector<16xf32>
    %57 = vector.multi_reduction <add>, %56, %cst_24 [1] : vector<16x16xf32> to vector<16xf32>
    %58 = vector.shape_cast %57 : vector<16xf32> to vector<16x1xf32>
    %59 = tpu.reciprocal %58 {approx = true} : vector<16x1xf32> -> vector<16x1xf32>
    %60 = vector.broadcast %59 : vector<16x1xf32> to vector<16x16xf32>
    %61 = arith.mulf %56, %60 : vector<16x16xf32>
    %62 = vector.extract_strided_slice %29 {offsets = [0, 8], sizes = [16, 8], strides = [1, 1]} : vector<16x32xf32> to vector<16x8xf32>
    %cst_25 = arith.constant dense<0.000000e+00> : vector<16x8xf32>
    %63 = tpu.matmul %61, %62, %cst_25 {dimension_numbers = #tpu.dot_dimension_numbers<[1], [0], [0], [1], [0, 0, 1, 1], [], []>} : vector<16x16xf32>, vector<16x8xf32>, vector<16x8xf32> -> vector<16x8xf32>
    %64 = vector.extract_strided_slice %27 {offsets = [0, 16], sizes = [16, 8], strides = [1, 1]} : vector<16x32xf32> to vector<16x8xf32>
    %65 = vector.extract_strided_slice %28 {offsets = [0, 16], sizes = [16, 8], strides = [1, 1]} : vector<16x32xf32> to vector<16x8xf32>
    "tpu.trace_start"() <{level = 10 : i32, message = "qd,kd->qk"}> : () -> ()
    %cst_26 = arith.constant dense<0.000000e+00> : vector<16x16xf32>
    %66 = tpu.matmul %64, %65, %cst_26 {dimension_numbers = #tpu.dot_dimension_numbers<[1], [1], [0], [0], [0, 0, 1, 0], [], []>} : vector<16x8xf32>, vector<16x8xf32>, vector<16x16xf32> -> vector<16x16xf32>
    %cst_27 = arith.constant -1.000000e+09 : f32
    "tpu.trace_stop"() : () -> ()
    %67 = vector.broadcast %cst_27 : f32 to vector<16x16xf32>
    %68 = arith.select %17, %66, %67 : vector<16x16xi1>, vector<16x16xf32>
    %cst_28 = arith.constant dense<0xFF800000> : vector<16xf32>
    %69 = vector.multi_reduction <maximumf>, %68, %cst_28 [1] : vector<16x16xf32> to vector<16xf32>
    %70 = vector.shape_cast %69 : vector<16xf32> to vector<16x1xf32>
    %71 = vector.broadcast %70 : vector<16x1xf32> to vector<16x16xf32>
    %72 = arith.subf %68, %71 : vector<16x16xf32>
    %73 = math.exp %72 : vector<16x16xf32>
    %cst_29 = arith.constant dense<0.000000e+00> : vector<16xf32>
    %74 = vector.multi_reduction <add>, %73, %cst_29 [1] : vector<16x16xf32> to vector<16xf32>
    %75 = vector.shape_cast %74 : vector<16xf32> to vector<16x1xf32>
    %76 = tpu.reciprocal %75 {approx = true} : vector<16x1xf32> -> vector<16x1xf32>
    %77 = vector.broadcast %76 : vector<16x1xf32> to vector<16x16xf32>
    %78 = arith.mulf %73, %77 : vector<16x16xf32>
    %79 = vector.extract_strided_slice %29 {offsets = [0, 16], sizes = [16, 8], strides = [1, 1]} : vector<16x32xf32> to vector<16x8xf32>
    %cst_30 = arith.constant dense<0.000000e+00> : vector<16x8xf32>
    %80 = tpu.matmul %78, %79, %cst_30 {dimension_numbers = #tpu.dot_dimension_numbers<[1], [0], [0], [1], [0, 0, 1, 1], [], []>} : vector<16x16xf32>, vector<16x8xf32>, vector<16x8xf32> -> vector<16x8xf32>
    %81 = vector.extract_strided_slice %27 {offsets = [0, 24], sizes = [16, 8], strides = [1, 1]} : vector<16x32xf32> to vector<16x8xf32>
    %82 = vector.extract_strided_slice %28 {offsets = [0, 24], sizes = [16, 8], strides = [1, 1]} : vector<16x32xf32> to vector<16x8xf32>
    "tpu.trace_start"() <{level = 10 : i32, message = "qd,kd->qk"}> : () -> ()
    %cst_31 = arith.constant dense<0.000000e+00> : vector<16x16xf32>
    %83 = tpu.matmul %81, %82, %cst_31 {dimension_numbers = #tpu.dot_dimension_numbers<[1], [1], [0], [0], [0, 0, 1, 0], [], []>} : vector<16x8xf32>, vector<16x8xf32>, vector<16x16xf32> -> vector<16x16xf32>
    %cst_32 = arith.constant -1.000000e+09 : f32
    "tpu.trace_stop"() : () -> ()
    %84 = vector.broadcast %cst_32 : f32 to vector<16x16xf32>
    %85 = arith.select %17, %83, %84 : vector<16x16xi1>, vector<16x16xf32>
    %cst_33 = arith.constant dense<0xFF800000> : vector<16xf32>
    %86 = vector.multi_reduction <maximumf>, %85, %cst_33 [1] : vector<16x16xf32> to vector<16xf32>
    %87 = vector.shape_cast %86 : vector<16xf32> to vector<16x1xf32>
    %88 = vector.broadcast %87 : vector<16x1xf32> to vector<16x16xf32>
    %89 = arith.subf %85, %88 : vector<16x16xf32>
    %90 = math.exp %89 : vector<16x16xf32>
    %cst_34 = arith.constant dense<0.000000e+00> : vector<16xf32>
    %91 = vector.multi_reduction <add>, %90, %cst_34 [1] : vector<16x16xf32> to vector<16xf32>
    %92 = vector.shape_cast %91 : vector<16xf32> to vector<16x1xf32>
    %93 = tpu.reciprocal %92 {approx = true} : vector<16x1xf32> -> vector<16x1xf32>
    %94 = vector.broadcast %93 : vector<16x1xf32> to vector<16x16xf32>
    %95 = arith.mulf %90, %94 : vector<16x16xf32>
    %96 = vector.extract_strided_slice %29 {offsets = [0, 24], sizes = [16, 8], strides = [1, 1]} : vector<16x32xf32> to vector<16x8xf32>
    %cst_35 = arith.constant dense<0.000000e+00> : vector<16x8xf32>
    %97 = tpu.matmul %95, %96, %cst_35 {dimension_numbers = #tpu.dot_dimension_numbers<[1], [0], [0], [1], [0, 0, 1, 1], [], []>} : vector<16x16xf32>, vector<16x8xf32>, vector<16x8xf32> -> vector<16x8xf32>
    %98 = tpu.concatenate %46, %63, %80, %97 in 1 : vector<16x8xf32>, vector<16x8xf32>, vector<16x8xf32>, vector<16x8xf32> -> vector<16x32xf32>
    %c0_36 = arith.constant 0 : index
    %c0_37 = arith.constant 0 : index
    %c0_38 = arith.constant 0 : index
    %99 = vector.load %arg7[%c0_36, %c0_37, %c0_38] : memref<1x32x32xf32, #tpu.memory_space<vmem>>, vector<1x32x32xf32>
    %100 = vector.shape_cast %99 : vector<1x32x32xf32> to vector<32x32xf32>
    %cst_39 = arith.constant dense<0.000000e+00> : vector<16x32xf32>
    %101 = tpu.matmul %98, %100, %cst_39 {dimension_numbers = #tpu.dot_dimension_numbers<[1], [0], [0], [1], [0, 0, 1, 1], [], []>} : vector<16x32xf32>, vector<32x32xf32>, vector<16x32xf32> -> vector<16x32xf32>
    %102 = vector.broadcast %6 : vector<1x32xf32> to vector<16x32xf32>
    %103 = arith.addf %101, %102 : vector<16x32xf32>
    %104 = arith.addf %103, %3 : vector<16x32xf32>
    %cst_40 = arith.constant dense<0.000000e+00> : vector<16xf32>
    %105 = vector.multi_reduction <add>, %104, %cst_40 [1] : vector<16x32xf32> to vector<16xf32>
    %106 = vector.shape_cast %105 : vector<16xf32> to vector<16x1xf32>
    %cst_41 = arith.constant 3.200000e+01 : f32
    %107 = vector.broadcast %cst_41 : f32 to vector<16x1xf32>
    %108 = arith.divf %106, %107 : vector<16x1xf32>
    %109 = vector.broadcast %108 : vector<16x1xf32> to vector<16x32xf32>
    %110 = arith.subf %104, %109 : vector<16x32xf32>
    %111 = arith.mulf %110, %110 : vector<16x32xf32>
    %cst_42 = arith.constant dense<0.000000e+00> : vector<16xf32>
    %112 = vector.multi_reduction <add>, %111, %cst_42 [1] : vector<16x32xf32> to vector<16xf32>
    %113 = vector.shape_cast %112 : vector<16xf32> to vector<16x1xf32>
    %cst_43 = arith.constant 3.200000e+01 : f32
    %114 = vector.broadcast %cst_43 : f32 to vector<16x1xf32>
    %115 = arith.divf %113, %114 : vector<16x1xf32>
    %116 = vector.broadcast %108 : vector<16x1xf32> to vector<16x32xf32>
    %117 = arith.subf %104, %116 : vector<16x32xf32>
    %cst_44 = arith.constant 9.99999996E-13 : f32
    %118 = vector.broadcast %cst_44 : f32 to vector<16x1xf32>
    %119 = arith.addf %115, %118 : vector<16x1xf32>
    %120 = math.rsqrt %119 : vector<16x1xf32>
    %121 = vector.broadcast %120 : vector<16x1xf32> to vector<16x32xf32>
    %122 = arith.mulf %117, %121 : vector<16x32xf32>
    %123 = vector.broadcast %7 : vector<1x32xf32> to vector<16x32xf32>
    %124 = arith.mulf %122, %123 : vector<16x32xf32>
    %125 = vector.broadcast %8 : vector<1x32xf32> to vector<16x32xf32>
    %126 = arith.addf %124, %125 : vector<16x32xf32>
    %c0_45 = arith.constant 0 : index
    %c0_46 = arith.constant 0 : index
    %c0_47 = arith.constant 0 : index
    %127 = vector.load %arg8[%c0_45, %c0_46, %c0_47] : memref<1x32x64xf32, #tpu.memory_space<vmem>>, vector<1x32x64xf32>
    %128 = vector.shape_cast %127 : vector<1x32x64xf32> to vector<32x64xf32>
    %cst_48 = arith.constant dense<0.000000e+00> : vector<16x64xf32>
    %129 = tpu.matmul %126, %128, %cst_48 {dimension_numbers = #tpu.dot_dimension_numbers<[1], [0], [0], [1], [0, 0, 1, 1], [], []>} : vector<16x32xf32>, vector<32x64xf32>, vector<16x64xf32> -> vector<16x64xf32>
    %130 = vector.broadcast %9 : vector<1x64xf32> to vector<16x64xf32>
    %131 = arith.addf %129, %130 : vector<16x64xf32>
    %cst_49 = arith.constant 5.000000e-01 : f32
    %132 = vector.broadcast %cst_49 : f32 to vector<16x64xf32>
    %133 = arith.mulf %132, %131 : vector<16x64xf32>
    %cst_50 = arith.constant 1.41421354 : f32
    %134 = vector.broadcast %cst_50 : f32 to vector<16x64xf32>
    %135 = arith.divf %131, %134 : vector<16x64xf32>
    %136 = math.erf %135 : vector<16x64xf32>
    %cst_51 = arith.constant 1.000000e+00 : f32
    %137 = vector.broadcast %cst_51 : f32 to vector<16x64xf32>
    %138 = arith.addf %137, %136 : vector<16x64xf32>
    %139 = arith.mulf %133, %138 : vector<16x64xf32>
    %c0_52 = arith.constant 0 : index
    %c0_53 = arith.constant 0 : index
    %c0_54 = arith.constant 0 : index
    %140 = vector.load %arg9[%c0_52, %c0_53, %c0_54] : memref<1x64x32xf32, #tpu.memory_space<vmem>>, vector<1x64x32xf32>
    %141 = vector.shape_cast %140 : vector<1x64x32xf32> to vector<64x32xf32>
    %cst_55 = arith.constant dense<0.000000e+00> : vector<16x32xf32>
    %142 = tpu.matmul %139, %141, %cst_55 {dimension_numbers = #tpu.dot_dimension_numbers<[1], [0], [0], [1], [0, 0, 1, 1], [], []>} : vector<16x64xf32>, vector<64x32xf32>, vector<16x32xf32> -> vector<16x32xf32>
    %143 = vector.broadcast %10 : vector<1x32xf32> to vector<16x32xf32>
    %144 = arith.addf %142, %143 : vector<16x32xf32>
    %145 = arith.addf %144, %126 : vector<16x32xf32>
    %cst_56 = arith.constant dense<0.000000e+00> : vector<16xf32>
    %146 = vector.multi_reduction <add>, %145, %cst_56 [1] : vector<16x32xf32> to vector<16xf32>
    %147 = vector.shape_cast %146 : vector<16xf32> to vector<16x1xf32>
    %cst_57 = arith.constant 3.200000e+01 : f32
    %148 = vector.broadcast %cst_57 : f32 to vector<16x1xf32>
    %149 = arith.divf %147, %148 : vector<16x1xf32>
    %150 = vector.broadcast %149 : vector<16x1xf32> to vector<16x32xf32>
    %151 = arith.subf %145, %150 : vector<16x32xf32>
    %152 = arith.mulf %151, %151 : vector<16x32xf32>
    %cst_58 = arith.constant dense<0.000000e+00> : vector<16xf32>
    %153 = vector.multi_reduction <add>, %152, %cst_58 [1] : vector<16x32xf32> to vector<16xf32>
    %154 = vector.shape_cast %153 : vector<16xf32> to vector<16x1xf32>
    %cst_59 = arith.constant 3.200000e+01 : f32
    %155 = vector.broadcast %cst_59 : f32 to vector<16x1xf32>
    %156 = arith.divf %154, %155 : vector<16x1xf32>
    %157 = vector.broadcast %149 : vector<16x1xf32> to vector<16x32xf32>
    %158 = arith.subf %145, %157 : vector<16x32xf32>
    %cst_60 = arith.constant 9.99999996E-13 : f32
    %159 = vector.broadcast %cst_60 : f32 to vector<16x1xf32>
    %160 = arith.addf %156, %159 : vector<16x1xf32>
    %161 = math.rsqrt %160 : vector<16x1xf32>
    %162 = vector.broadcast %161 : vector<16x1xf32> to vector<16x32xf32>
    %163 = arith.mulf %158, %162 : vector<16x32xf32>
    %164 = vector.broadcast %11 : vector<1x32xf32> to vector<16x32xf32>
    %165 = arith.mulf %163, %164 : vector<16x32xf32>
    %166 = vector.broadcast %12 : vector<1x32xf32> to vector<16x32xf32>
    %167 = arith.addf %165, %166 : vector<16x32xf32>
    %c0_61 = arith.constant 0 : index
    %c0_62 = arith.constant 0 : index
    %168 = vector.load %arg13[%c0_61, %c0_62] : memref<16x32xf32, #tpu.memory_space<vmem>>, vector<16x32xf32>
    tpu.vector_store %arg13[%c0_61, %c0_62], %167 {strides = array<i32>} : memref<16x32xf32, #tpu.memory_space<vmem>>, vector<16x32xf32>,
    %c0_i32_63 = arith.constant 0 : i32
    %169 = arith.cmpi eq, %arg0, %c0_i32_63 : i32
    %170 = arith.extui %169 : i1 to i32
    %c0_i32_64 = arith.constant 0 : i32
    %171 = arith.cmpi ne, %170, %c0_i32_64 : i32
    scf.if %171 {
      %c0_65 = arith.constant 0 : index
      %c0_66 = arith.constant 0 : index
      %172 = vector.load %arg12[%c0_65, %c0_66] : memref<8x64xf32, #tpu.memory_space<vmem>>, vector<8x64xf32>
      %173 = vector.extract_strided_slice %172 {offsets = [0, 0], sizes = [1, 32], strides = [1, 1]} : vector<8x64xf32> to vector<1x32xf32>
      %174 = vector.extract_strided_slice %172 {offsets = [1, 0], sizes = [1, 32], strides = [1, 1]} : vector<8x64xf32> to vector<1x32xf32>
      %175 = vector.extract_strided_slice %172 {offsets = [2, 0], sizes = [1, 1], strides = [1, 1]} : vector<8x64xf32> to vector<1x1xf32>
      %c0_67 = arith.constant 0 : index
      %c0_68 = arith.constant 0 : index
      %176 = vector.load %arg11[%c0_67, %c0_68] : memref<32x32xf32, #tpu.memory_space<vmem>>, vector<32x32xf32>
      %cst_69 = arith.constant dense<0.000000e+00> : vector<16x32xf32>
      %177 = tpu.matmul %167, %176, %cst_69 {dimension_numbers = #tpu.dot_dimension_numbers<[1], [0], [0], [1], [0, 0, 1, 1], [], []>} : vector<16x32xf32>, vector<32x32xf32>, vector<16x32xf32> -> vector<16x32xf32>
      %178 = vector.broadcast %173 : vector<1x32xf32> to vector<16x32xf32>
      %179 = arith.addf %177, %178 : vector<16x32xf32>
      %cst_70 = arith.constant 5.000000e-01 : f32
      %180 = vector.broadcast %cst_70 : f32 to vector<16x32xf32>
      %181 = arith.mulf %180, %179 : vector<16x32xf32>
      %cst_71 = arith.constant 1.41421354 : f32
      %182 = vector.broadcast %cst_71 : f32 to vector<16x32xf32>
      %183 = arith.divf %179, %182 : vector<16x32xf32>
      %184 = math.erf %183 : vector<16x32xf32>
      %cst_72 = arith.constant 1.000000e+00 : f32
      %185 = vector.broadcast %cst_72 : f32 to vector<16x32xf32>
      %186 = arith.addf %185, %184 : vector<16x32xf32>
      %187 = arith.mulf %181, %186 : vector<16x32xf32>
      %188 = tpu.transpose %187, [1, 0] : vector<16x32xf32> -> vector<32x16xf32>
      %cst_73 = arith.constant dense<0.000000e+00> : vector<1x16xf32>
      %189 = tpu.matmul %174, %188, %cst_73 {dimension_numbers = #tpu.dot_dimension_numbers<[1], [0], [0], [1], [0, 0, 1, 1], [], []>} : vector<1x32xf32>, vector<32x16xf32>, vector<1x16xf32> -> vector<1x16xf32>
      %190 = vector.broadcast %175 : vector<1x1xf32> to vector<1x16xf32>
      %191 = arith.addf %189, %190 : vector<1x16xf32>
      %cst_74 = arith.constant 0.000000e+00 : f32
      %192 = vector.broadcast %cst_74 : f32 to vector<1x16xf32>
      %193 = arith.subf %192, %191 : vector<1x16xf32>
      %194 = math.exp %193 : vector<1x16xf32>
      %cst_75 = arith.constant 1.000000e+00 : f32
      %195 = vector.broadcast %cst_75 : f32 to vector<1x16xf32>
      %196 = arith.addf %195, %194 : vector<1x16xf32>
      %197 = tpu.reciprocal %196 {approx = true} : vector<1x16xf32> -> vector<1x16xf32>
      %c0_76 = arith.constant 0 : index
      %c0_77 = arith.constant 0 : index
      %198 = vector.load %arg2[%c0_76, %c0_77] : memref<1x16xf32, #tpu.memory_space<vmem>>, vector<1x16xf32>
      %199 = arith.mulf %197, %198 : vector<1x16xf32>
      %c0_78 = arith.constant 0 : index
      %c0_79 = arith.constant 0 : index
      %200 = vector.load %arg14[%c0_78, %c0_79] : memref<1x16xf32, #tpu.memory_space<vmem>>, vector<1x16xf32>
      tpu.vector_store %arg14[%c0_78, %c0_79], %199 {strides = array<i32>} : memref<1x16xf32, #tpu.memory_space<vmem>>, vector<1x16xf32>,
    } else {
    }
    return
  }
  func.func @transform_0(%arg0: i32) -> (i32, i32) {
    %c0_i32 = arith.constant 0 : i32
    %c0_i32_0 = arith.constant 0 : i32
    %c0_i32_1 = arith.constant 0 : i32
    return %c0_i32, %c0_i32_0 : i32, i32
  }
  func.func @transform_1(%arg0: i32) -> (i32, i32) {
    %c0_i32 = arith.constant 0 : i32
    %c0_i32_0 = arith.constant 0 : i32
    %c0_i32_1 = arith.constant 0 : i32
    return %c0_i32, %c0_i32_0 : i32, i32
  }
  func.func @transform_2(%arg0: i32) -> (i32, i32) {
    %c0_i32 = arith.constant 0 : i32
    %c0_i32_0 = arith.constant 0 : i32
    %c0_i32_1 = arith.constant 0 : i32
    return %c0_i32, %c0_i32_0 : i32, i32
  }
  func.func @transform_3(%arg0: i32) -> (i32, i32) {
    %c0_i32 = arith.constant 0 : i32
    %c0_i32_0 = arith.constant 0 : i32
    %c0_i32_1 = arith.constant 0 : i32
    return %c0_i32, %c0_i32_0 : i32, i32
  }
  func.func @transform_4(%arg0: i32) -> (i32, i32, i32) {
    %c0_i32 = arith.constant 0 : i32
    %0 = arith.addi %c0_i32, %arg0 : i32
    %c0_i32_0 = arith.constant 0 : i32
    %c0_i32_1 = arith.constant 0 : i32
    %c0_i32_2 = arith.constant 0 : i32
    return %0, %c0_i32_0, %c0_i32_1 : i32, i32, i32
  }
  func.func @transform_5(%arg0: i32) -> (i32, i32, i32) {
    %c0_i32 = arith.constant 0 : i32
    %0 = arith.addi %c0_i32, %arg0 : i32
    %c0_i32_0 = arith.constant 0 : i32
    %c0_i32_1 = arith.constant 0 : i32
    %c0_i32_2 = arith.constant 0 : i32
    return %0, %c0_i32_0, %c0_i32_1 : i32, i32, i32
  }
  func.func @transform_6(%arg0: i32) -> (i32, i32, i32) {
    %c0_i32 = arith.constant 0 : i32
    %0 = arith.addi %c0_i32, %arg0 : i32
    %c0_i32_0 = arith.constant 0 : i32
    %c0_i32_1 = arith.constant 0 : i32
    %c0_i32_2 = arith.constant 0 : i32
    return %0, %c0_i32_0, %c0_i32_1 : i32, i32, i32
  }
  func.func @transform_7(%arg0: i32) -> (i32, i32, i32) {
    %c0_i32 = arith.constant 0 : i32
    %0 = arith.addi %c0_i32, %arg0 : i32
    %c0_i32_0 = arith.constant 0 : i32
    %c0_i32_1 = arith.constant 0 : i32
    %c0_i32_2 = arith.constant 0 : i32
    return %0, %c0_i32_0, %c0_i32_1 : i32, i32, i32
  }
  func.func @transform_8(%arg0: i32) -> (i32, i32, i32) {
    %c0_i32 = arith.constant 0 : i32
    %0 = arith.addi %c0_i32, %arg0 : i32
    %c0_i32_0 = arith.constant 0 : i32
    %c0_i32_1 = arith.constant 0 : i32
    %c0_i32_2 = arith.constant 0 : i32
    return %0, %c0_i32_0, %c0_i32_1 : i32, i32, i32
  }
  func.func @transform_9(%arg0: i32) -> (i32, i32, i32) {
    %c0_i32 = arith.constant 0 : i32
    %0 = arith.addi %c0_i32, %arg0 : i32
    %c0_i32_0 = arith.constant 0 : i32
    %c0_i32_1 = arith.constant 0 : i32
    %c0_i32_2 = arith.constant 0 : i32
    return %0, %c0_i32_0, %c0_i32_1 : i32, i32, i32
  }
  func.func @transform_10(%arg0: i32) -> (i32, i32) {
    %c0_i32 = arith.constant 0 : i32
    %c0_i32_0 = arith.constant 0 : i32
    %c0_i32_1 = arith.constant 0 : i32
    return %c0_i32, %c0_i32_0 : i32, i32
  }
  func.func @transform_11(%arg0: i32) -> (i32, i32) {
    %c0_i32 = arith.constant 0 : i32
    %c0_i32_0 = arith.constant 0 : i32
    %c0_i32_1 = arith.constant 0 : i32
    return %c0_i32, %c0_i32_0 : i32, i32
  }
  func.func @transform_12(%arg0: i32) -> (i32, i32) {
    %c0_i32 = arith.constant 0 : i32
    %c0_i32_0 = arith.constant 0 : i32
    %c0_i32_1 = arith.constant 0 : i32
    return %c0_i32, %c0_i32_0 : i32, i32
  }
  func.func @transform_13(%arg0: i32) -> (i32, i32) {
    %c0_i32 = arith.constant 0 : i32
    %c0_i32_0 = arith.constant 0 : i32
    %c0_i32_1 = arith.constant 0 : i32
    return %c0_i32, %c0_i32_0 : i32, i32
  }
}

</mosaic_0001>

<llo_original>
// kernel: tpu_custom_call.1
$region0: #{tpu_custom_call.1}
  #allocation0 [shape = 'u32[]', space=smem, size = 0x4, offset = 0x4, fixed_abs, tag = 'smem constant byte address 0x4 - core index']
  #allocation1 [shape = 'u32[144,128]{1,0:T(1,128)}', space=vmem, size = 0x12000, scoped, tag = 'internal scratch']
  %s0 = inlined_call_operand.hbm [shape: f32[16,32], index: 0, kind: input, shape index: {}]
  %s1 = inlined_call_operand.hbm [shape: f32[1,16], index: 1, kind: input, shape index: {}]
  %s2 = inlined_call_operand.vmem [shape: f32[16,1], index: 2, kind: input, shape index: {}]
  %s3 = inlined_call_operand.hbm [shape: f32[1,16], index: 3, kind: input, shape index: {}]
  %s4 = inlined_call_operand.vmem [shape: f32[4,32,96], index: 4, kind: input, shape index: {}]
  %s5 = inlined_call_operand.hbm [shape: f32[4,1,96], index: 5, kind: input, shape index: {}]
  %s6 = inlined_call_operand.vmem [shape: f32[4,32,32], index: 6, kind: input, shape index: {}]
  %s7 = inlined_call_operand.vmem [shape: f32[4,32,64], index: 7, kind: input, shape index: {}]
  %s8 = inlined_call_operand.vmem [shape: f32[4,64,32], index: 8, kind: input, shape index: {}]
  %s9 = inlined_call_operand.vmem [shape: f32[4,8,64], index: 9, kind: input, shape index: {}]
  %s10 = inlined_call_operand.hbm [shape: f32[32,32], index: 10, kind: input, shape index: {}]
  %s11 = inlined_call_operand.vmem [shape: f32[8,64], index: 11, kind: input, shape index: {}]
  %s12 = inlined_call_operand.hbm [shape: f32[16,32], index: 12, kind: output, shape index: {0}]
  %s13 = inlined_call_operand.hbm [shape: f32[1,16], index: 13, kind: output, shape index: {1}]
  %14 = xla_tuple %s12, %s13
  %s15 = sld [smem:[#allocation0]]
  $region94: #{tpu_custom_call.1} parent=0
    _
  %s17 = ssub.s32 1, %s15
  %s18 = scalar_select 0, %s17, %s15
  $region1: #{tpu_custom_call.1} parent=0
    #allocation2 [shape = 'u8[8192]{0}', space=vmem, size = 0x2000, scoped, tag = 'input window, operand 0, single buffered']
    #allocation3 [shape = 's32[1]{0}', space=sflag, size = 0x4, scoped, tag = 'scoped memory for tpu_custom_call.1']
    #allocation4 [shape = 's32[1]{0}', space=sflag, size = 0x4, scoped, tag = 'scoped memory for tpu_custom_call.1']
    #allocation5 [shape = 'u8[512]{0}', space=vmem, size = 0x400, scoped, tag = 'input window, operand 1, single buffered']
    #allocation6 [shape = 's32[1]{0}', space=sflag, size = 0x4, scoped, tag = 'scoped memory for tpu_custom_call.1']
    #allocation7 [shape = 'u8[512]{0}', space=vmem, size = 0x400, scoped, tag = 'input window, operand 3, single buffered']
    #allocation8 [shape = 'u8[512]{0}', space=vmem, size = 0x400, scoped, tag = 'input window, operand 5, single buffered']
    #allocation9 [shape = 's32[1]{0}', space=sflag, size = 0x4, scoped, tag = 'scoped memory for tpu_custom_call.1']
    #allocation10 [shape = 'u8[16384]{0}', space=vmem, size = 0x4000, scoped, tag = 'input window, operand 10, single buffered']
    #allocation11 [shape = 'u8[8192]{0}', space=vmem, size = 0x2000, scoped, tag = 'output window, operand 0, single buffered']
    #allocation12 [shape = 'u8[512]{0}', space=vmem, size = 0x400, scoped, tag = 'output window, operand 1, single buffered']
    #allocation13 [shape = 's32[1]{0}', space=sflag, size = 0x4, scoped, tag = 'scoped memory for tpu_custom_call.1']
    %19 = vsyncpa [#allocation3], 0
    %20 = vsyncpa [#allocation6], 0
    %21 = vsyncpa [#allocation9], 0
    %22 = vsyncpa [#allocation4], 0
    %23 = vsyncpa [#allocation13], 0
    // Predicated region
    $region2: #{tpu_custom_call.1} parent=1 // pred_check
      _
    $region3: #{tpu_custom_call.1} parent=1 // pred_check_branch
      %25 = sbr.rel (0) target = $region5
    $region4: #{tpu_custom_call.1} parent=1 // pred_region
      %s27 = ssub.s32 256, 256
      %28 = vsyncadd [#allocation3], %s27
      %s29 = sshll.u32 [#allocation2], 4
      %s30 = int_to_ptr.vmem [resolvable:$true] %s29
      %35 = dma.hbm_to_vmem [thread:$0]  %s0, 256, %s30, [#allocation3], 128, 128, 8
    $region5: #{tpu_custom_call.1} parent=1 // pred_fallthru
      _
    // Predicated region
    $region6: #{tpu_custom_call.1} parent=1 // pred_check
      _
    $region7: #{tpu_custom_call.1} parent=1 // pred_check_branch
      %37 = sbr.rel (0) target = $region9
    $region8: #{tpu_custom_call.1} parent=1 // pred_region
      %s39 = ssub.s32 16, 16
      %40 = vsyncadd [#allocation6], %s39
      %s42 = sshll.u32 [#allocation5], 4
      %s43 = int_to_ptr.vmem [resolvable:$true] %s42
      %45 = dma.hbm_to_vmem [thread:$0]  %s1, 16, %s43, [#allocation6]
    $region9: #{tpu_custom_call.1} parent=1 // pred_fallthru
      _
    // Predicated region
    $region10: #{tpu_custom_call.1} parent=1 // pred_check
      _
    $region11: #{tpu_custom_call.1} parent=1 // pred_check_branch
      %47 = sbr.rel (0) target = $region13
    $region12: #{tpu_custom_call.1} parent=1 // pred_region
      _
    $region13: #{tpu_custom_call.1} parent=1 // pred_fallthru
      _
    // Predicated region
    $region14: #{tpu_custom_call.1} parent=1 // pred_check
      _
    $region15: #{tpu_custom_call.1} parent=1 // pred_check_branch
      %49 = sbr.rel (0) target = $region17
    $region16: #{tpu_custom_call.1} parent=1 // pred_region
      %s51 = ssub.s32 16, 16
      %52 = vsyncadd [#allocation6], %s51
      %s54 = sshll.u32 [#allocation7], 4
      %s55 = int_to_ptr.vmem [resolvable:$true] %s54
      %57 = dma.hbm_to_vmem [thread:$0]  %s3, 16, %s55, [#allocation6]
    $region17: #{tpu_custom_call.1} parent=1 // pred_fallthru
      _
    // Predicated region
    $region18: #{tpu_custom_call.1} parent=1 // pred_check
      _
    $region19: #{tpu_custom_call.1} parent=1 // pred_check_branch
      %59 = sbr.rel (0) target = $region21
    $region20: #{tpu_custom_call.1} parent=1 // pred_region
      _
    $region21: #{tpu_custom_call.1} parent=1 // pred_fallthru
      _
    // Predicated region
    $region22: #{tpu_custom_call.1} parent=1 // pred_check
      _
    $region23: #{tpu_custom_call.1} parent=1 // pred_check_branch
      %61 = sbr.rel (0) target = $region25
    $region24: #{tpu_custom_call.1} parent=1 // pred_region
      %s63 = ssub.s32 16, 16
      %64 = vsyncadd [#allocation9], %s63
      %s66 = sshll.u32 [#allocation8], 4
      %s67 = int_to_ptr.vmem [resolvable:$true] %s66
      %69 = dma.hbm_to_vmem [thread:$0]  %s5, 16, %s67, [#allocation9]
    $region25: #{tpu_custom_call.1} parent=1 // pred_fallthru
      _
    // Predicated region
    $region26: #{tpu_custom_call.1} parent=1 // pred_check
      _
    $region27: #{tpu_custom_call.1} parent=1 // pred_check_branch
      %71 = sbr.rel (0) target = $region29
    $region28: #{tpu_custom_call.1} parent=1 // pred_region
      _
    $region29: #{tpu_custom_call.1} parent=1 // pred_fallthru
      _
    // Predicated region
    $region30: #{tpu_custom_call.1} parent=1 // pred_check
      _
    $region31: #{tpu_custom_call.1} parent=1 // pred_check_branch
      %73 = sbr.rel (0) target = $region33
    $region32: #{tpu_custom_call.1} parent=1 // pred_region
      _
    $region33: #{tpu_custom_call.1} parent=1 // pred_fallthru
      _
    // Predicated region
    $region34: #{tpu_custom_call.1} parent=1 // pred_check
      _
    $region35: #{tpu_custom_call.1} parent=1 // pred_check_branch
      %75 = sbr.rel (0) target = $region37
    $region36: #{tpu_custom_call.1} parent=1 // pred_region
      _
    $region37: #{tpu_custom_call.1} parent=1 // pred_fallthru
      _
    // Predicated region
    $region38: #{tpu_custom_call.1} parent=1 // pred_check
      _
    $region39: #{tpu_custom_call.1} parent=1 // pred_check_branch
      %77 = sbr.rel (0) target = $region41
    $region40: #{tpu_custom_call.1} parent=1 // pred_region
      _
    $region41: #{tpu_custom_call.1} parent=1 // pred_fallthru
      _
    // Predicated region
    $region42: #{tpu_custom_call.1} parent=1 // pred_check
      _
    $region43: #{tpu_custom_call.1} parent=1 // pred_check_branch
      %79 = sbr.rel (0) target = $region45
    $region44: #{tpu_custom_call.1} parent=1 // pred_region
      %s81 = ssub.s32 512, 512
      %82 = vsyncadd [#allocation9], %s81
      %s83 = sshll.u32 [#allocation10], 4
      %s84 = int_to_ptr.vmem [resolvable:$true] %s83
      %89 = dma.hbm_to_vmem [thread:$0]  %s10, 512, %s84, [#allocation9], 128, 128, 8
    $region45: #{tpu_custom_call.1} parent=1 // pred_fallthru
      _
    // Predicated region
    $region46: #{tpu_custom_call.1} parent=1 // pred_check
      _
    $region47: #{tpu_custom_call.1} parent=1 // pred_check_branch
      %91 = sbr.rel (0) target = $region49
    $region48: #{tpu_custom_call.1} parent=1 // pred_region
      _
    $region49: #{tpu_custom_call.1} parent=1 // pred_fallthru
      _
    // Predicated region
    $region50: #{tpu_custom_call.1} parent=1 // pred_check
      _
    $region51: #{tpu_custom_call.1} parent=1 // pred_check_branch
      %93 = sbr.rel (0) target = $region53
    $region52: #{tpu_custom_call.1} parent=1 // pred_region
      %94 = dma.done [#allocation3], 256
    $region53: #{tpu_custom_call.1} parent=1 // pred_fallthru
      _
    // Predicated region
    $region54: #{tpu_custom_call.1} parent=1 // pred_check
      _
    $region55: #{tpu_custom_call.1} parent=1 // pred_check_branch
      %96 = sbr.rel (0) target = $region57
    $region56: #{tpu_custom_call.1} parent=1 // pred_region
      %97 = dma.done [#allocation6], 16
    $region57: #{tpu_custom_call.1} parent=1 // pred_fallthru
      _
    // Predicated region
    $region58: #{tpu_custom_call.1} parent=1 // pred_check
      _
    $region59: #{tpu_custom_call.1} parent=1 // pred_check_branch
      %99 = sbr.rel (0) target = $region61
    $region60: #{tpu_custom_call.1} parent=1 // pred_region
      %100 = dma.done [#allocation6], 16
    $region61: #{tpu_custom_call.1} parent=1 // pred_fallthru
      _
    // Predicated region
    $region62: #{tpu_custom_call.1} parent=1 // pred_check
      _
    $region63: #{tpu_custom_call.1} parent=1 // pred_check_branch
      %102 = sbr.rel (0) target = $region65
    $region64: #{tpu_custom_call.1} parent=1 // pred_region
      %103 = dma.done [#allocation9], 16
    $region65: #{tpu_custom_call.1} parent=1 // pred_fallthru
      _
    // Predicated region
    $region66: #{tpu_custom_call.1} parent=1 // pred_check
      _
    $region67: #{tpu_custom_call.1} parent=1 // pred_check_branch
      %105 = sbr.rel (0) target = $region69
    $region68: #{tpu_custom_call.1} parent=1 // pred_region
      %106 = dma.done [#allocation9], 512
    $region69: #{tpu_custom_call.1} parent=1 // pred_fallthru
      _
    %p107 = scmp.eq.s32.totalorder 0, 0
    // Predicated region
    $region70: #{tpu_custom_call.1} parent=1 // pred_check
      %p108 = pneg %p107
    $region71: #{tpu_custom_call.1} parent=1 // pred_check_branch
      %110 = sbr.rel (%p108) target = $region73
    $region72: #{tpu_custom_call.1} parent=1 // pred_region
      %v111 = vld [vmem:[#allocation2] sm:$0xff]
      %v112 = vld [vmem:[#allocation2 + $0x8] sm:$0xff]
      %vm113 = vcmask 261120
      %114 = vst.msk [vmem:[#allocation11] sm:$0xff] %vm113, %v111
      %115 = vst.msk [vmem:[#allocation11 + $0x8] sm:$0xff] %vm113, %v112
    $region73: #{tpu_custom_call.1} parent=1 // pred_fallthru
      _
    %v116 = vld [vmem:[#allocation11] sm:$0xff]
    %v117 = vld [vmem:[#allocation11 + $0x8] sm:$0xff]
    %v118 = vld [vmem:[%s9] sm:$0xff]
    %v119 = vld [vmem:[%s2] sm:$0xff]
    %v120 = vld [vmem:[%s2 + $0x8] sm:$0xff]
    %v121 = vld [vmem:[#allocation7] sm:$0x1]
    %123 = vset.pattern.permute.xlu0 0
    %124 = vperm.xlu0 %123, %v119
    %v125 = vpop.permute.xlu0 %124
    %128 = vset.pattern.permute.xlu0 0
    %129 = vperm.xlu0 %128, %v120
    %v130 = vpop.permute.xlu0 %129
    %v133 = vlaneseq
    %v134 = vshrl.u32 %v133, 7
    %v135 = vsub.s32 0, %v134
    %v136 = vrot.slane %v121, %v135
    %vm138 = vcmp.eq.f32.partialorder %v125, %v136
    %vm139 = vcmp.eq.f32.partialorder %v130, %v136
    %v140 = vld [vmem:[%s4] sm:$0xff]
    %v141 = vld [vmem:[%s4 + $0x8] sm:$0xff]
    %v142 = vld [vmem:[%s4 + $0x10] sm:$0xff]
    %v143 = vld [vmem:[%s4 + $0x18] sm:$0xff]
    %v144 = vld [vmem:[#allocation8] sm:$0x1]
    %v146 = vlaneseq
    %v147 = vshrl.u32 %v146, 7
    %v148 = vsub.s32 0, %v147
    %v149 = vrot.slane %v144, %v148
    %vm151 = vcmask 261120
    %v153 = vsel %vm151, %v116, 0
    %v156 = vsel %vm151, %v117, 0
    %158 = vmatprep.subr.mxu0 0.0
    %159 = vmatpush1.msra.mxu0 %v140
    %160 = vmatprep.subr.mxu0 0.0
    %161 = vmatpush1.msra.mxu0 %v141
    %162 = vmatprep.subr.mxu0 0.0
    %163 = vmatpush1.msra.mxu0 %v142
    %164 = vmatprep.subr.mxu0 0.0
    %165 = vmatpush1.msra.mxu0 %v143
    %166 = vmatprep.subr.mxu0 0.0
    %167 = vmatpush1.msra.mxu0 0.0
    %168 = vmatprep.subr.mxu0 0.0
    %169 = vmatpush1.msra.mxu0 0.0
    %170 = vmatprep.subr.mxu0 0.0
    %171 = vmatpush1.msra.mxu0 0.0
    %172 = vmatprep.subr.mxu0 0.0
    %173 = vmatpush1.msra.mxu0 0.0
    %174 = vmatprep.subr.mxu0 0.0
    %175 = vmatpush1.msra.mxu0 0.0
    %176 = vmatprep.subr.mxu0 0.0
    %177 = vmatpush1.msra.mxu0 0.0
    %178 = vmatprep.subr.mxu0 0.0
    %179 = vmatpush1.msra.mxu0 0.0
    %180 = vmatprep.subr.mxu0 0.0
    %181 = vmatpush1.msra.mxu0 0.0
    %182 = vmatprep.subr.mxu0 0.0
    %183 = vmatpush1.msra.mxu0 0.0
    %184 = vmatprep.subr.mxu0 0.0
    %185 = vmatpush1.msra.mxu0 0.0
    %186 = vmatprep.subr.mxu0 0.0
    %187 = vmatpush1.msra.mxu0 0.0
    %188 = vmatprep.subr.mxu0 0.0
    %189 = vmatpush1.msra.mxu0 0.0
    %190 = vmatprep.subr.mxu0 0.0
    %191 = vmatpush1.msra.mxu0 0.0
    %192 = vmatprep.subr.mxu0 0.0
    %193 = vmatpush1.msra.mxu0 0.0
    %194 = vmatprep.subr.mxu0 0.0
    %195 = vmatpush1.msra.mxu0 0.0
    %196 = vmatprep.subr.mxu0 0.0
    %197 = vmatpush1.msra.mxu0 0.0
    %198 = vmatprep.subr.mxu0 0.0
    %199 = vmatpush1.msra.mxu0 0.0
    %200 = vmatprep.subr.mxu0 0.0
    %201 = vmatpush1.msra.mxu0 0.0
    %202 = vmatprep.subr.mxu0 0.0
    %203 = vmatpush1.msra.mxu0 0.0
    %204 = vmatprep.subr.mxu0 0.0
    %205 = vmatpush1.msra.mxu0 0.0
    %206 = vmatprep.subr.mxu0 0.0
    %207 = vmatpush1.msra.mxu0 0.0
    %208 = vmatprep.subr.mxu0 0.0
    %209 = vmatpush1.msra.mxu0 0.0
    %210 = vmatprep.subr.mxu0 0.0
    %211 = vmatpush1.msra.mxu0 0.0
    %212 = vmatprep.subr.mxu0 0.0
    %213 = vmatpush1.msra.mxu0 0.0
    %214 = vmatprep.subr.mxu0 0.0
    %215 = vmatpush1.msra.mxu0 0.0
    %216 = vmatprep.subr.mxu0 0.0
    %217 = vmatpush1.msra.mxu0 0.0
    %218 = vmatprep.subr.mxu0 0.0
    %219 = vmatpush1.msra.mxu0 0.0
    %220 = vmatprep.subr.mxu0 0.0
    %221 = vmatpush1.msra.mxu0 0.0
    %222 = vmatprep.mubr.f32.mxu0 0.0
    %223 = vmatmul.mubr.f32.gmra.mrb[0].mxu0 %v153
    %v224 = vpop.f32.mrb[0].mxu0
    %v225 = vadd.f32 %v149, %v224
    %v226 = vpop.f32.mrb[0].mxu0
    %227 = vmatprep.mubr.f32.mxu0 0.0
    %228 = vmatmul.mubr.f32.gmra.mrb[0].mxu0 %v156
    %v229 = vpop.f32.mrb[0].mxu0
    %v230 = vadd.f32 %v149, %v229
    %v231 = vpop.f32.mrb[0].mxu0
    %232 = vdwg.mxu0
    %v233 = vmul.f32 %v225, 0.35355338
    %v234 = vmul.f32 %v230, 0.35355338
    %237 = vrot.lane.b32.xlu0 %v225, 96
    %v238 = vpop.permute.xlu0 %237
    %239 = vrot.lane.b32.xlu0 %v230, 96
    %v240 = vpop.permute.xlu0 %239
    %vm241 = vcmask 64512
    %v243 = vsel %vm241, %v233, 0
    %v246 = vsel %vm241, %v234, 0
    %v248 = vsel %vm241, %v238, 0
    %v250 = vsel %vm241, %v240, 0
    %252 = vmatprep.subr.mxu0 0.0
    %253 = vmatpush1.xpose.msra.mxu0 %v248
    %254 = vmatprep.subr.mxu0 0.0
    %255 = vmatpush1.xpose.msra.mxu0 %v250
    %256 = vmatprep.subr.mxu0 0.0
    %257 = vmatpush1.xpose.msra.mxu0 0.0
    %258 = vmatprep.subr.mxu0 0.0
    %259 = vmatpush1.xpose.msra.mxu0 0.0
    %260 = vmatprep.subr.mxu0 0.0
    %261 = vmatpush1.xpose.msra.mxu0 0.0
    %262 = vmatprep.subr.mxu0 0.0
    %263 = vmatpush1.xpose.msra.mxu0 0.0
    %264 = vmatprep.subr.mxu0 0.0
    %265 = vmatpush1.xpose.msra.mxu0 0.0
    %266 = vmatprep.subr.mxu0 0.0
    %267 = vmatpush1.xpose.msra.mxu0 0.0
    %268 = vmatprep.subr.mxu0 0.0
    %269 = vmatpush1.xpose.msra.mxu0 0.0
    %270 = vmatprep.subr.mxu0 0.0
    %271 = vmatpush1.xpose.msra.mxu0 0.0
    %272 = vmatprep.subr.mxu0 0.0
    %273 = vmatpush1.xpose.msra.mxu0 0.0
    %274 = vmatprep.subr.mxu0 0.0
    %275 = vmatpush1.xpose.msra.mxu0 0.0
    %276 = vmatprep.subr.mxu0 0.0
    %277 = vmatpush1.xpose.msra.mxu0 0.0
    %278 = vmatprep.subr.mxu0 0.0
    %279 = vmatpush1.xpose.msra.mxu0 0.0
    %280 = vmatprep.subr.mxu0 0.0
    %281 = vmatpush1.xpose.msra.mxu0 0.0
    %282 = vmatprep.subr.mxu0 0.0
    %283 = vmatpush1.xpose.msra.mxu0 0.0
    %284 = vmatprep.subr.mxu0 0.0
    %285 = vmatpush1.xpose.msra.mxu0 0.0
    %286 = vmatprep.subr.mxu0 0.0
    %287 = vmatpush1.xpose.msra.mxu0 0.0
    %288 = vmatprep.subr.mxu0 0.0
    %289 = vmatpush1.xpose.msra.mxu0 0.0
    %290 = vmatprep.subr.mxu0 0.0
    %291 = vmatpush1.xpose.msra.mxu0 0.0
    %292 = vmatprep.subr.mxu0 0.0
    %293 = vmatpush1.xpose.msra.mxu0 0.0
    %294 = vmatprep.subr.mxu0 0.0
    %295 = vmatpush1.xpose.msra.mxu0 0.0
    %296 = vmatprep.subr.mxu0 0.0
    %297 = vmatpush1.xpose.msra.mxu0 0.0
    %298 = vmatprep.subr.mxu0 0.0
    %299 = vmatpush1.xpose.msra.mxu0 0.0
    %300 = vmatprep.subr.mxu0 0.0
    %301 = vmatpush1.xpose.msra.mxu0 0.0
    %302 = vmatprep.subr.mxu0 0.0
    %303 = vmatpush1.xpose.msra.mxu0 0.0
    %304 = vmatprep.subr.mxu0 0.0
    %305 = vmatpush1.xpose.msra.mxu0 0.0
    %306 = vmatprep.subr.mxu0 0.0
    %307 = vmatpush1.xpose.msra.mxu0 0.0
    %308 = vmatprep.subr.mxu0 0.0
    %309 = vmatpush1.xpose.msra.mxu0 0.0
    %310 = vmatprep.subr.mxu0 0.0
    %311 = vmatpush1.xpose.msra.mxu0 0.0
    %312 = vmatprep.subr.mxu0 0.0
    %313 = vmatpush1.xpose.msra.mxu0 0.0
    %314 = vmatprep.subr.mxu0 0.0
    %315 = vmatpush1.xpose.msra.mxu0 0.0
    %316 = vmatprep.mubr.f32.mxu0 0.0
    %317 = vmatmul.mubr.f32.gmra.mrb[0].mxu0 %v243
    %v318 = vpop.f32.mrb[0].mxu0
    %v319 = vadd.f32 0.0, %v318
    %v320 = vpop.f32.mrb[0].mxu0
    %321 = vmatprep.mubr.f32.mxu0 0.0
    %322 = vmatmul.mubr.f32.gmra.mrb[0].mxu0 %v246
    %v323 = vpop.f32.mrb[0].mxu0
    %v324 = vadd.f32 0.0, %v323
    %v325 = vpop.f32.mrb[0].mxu0
    %326 = vdwg.mxu0
    %v327 = vsel %vm138, %v319, -1e+09
    %v328 = vsel %vm139, %v324, -1e+09
    %vm329 = vcmask 130048
    %v330 = vsel %vm329, %v327, -inf
    %331 = vmax.xlane.f32.xlu0 %v330
    %v332 = vpop.xlane.xlu0 %331
    %v333 = vsel %vm329, %v328, -inf
    %334 = vmax.xlane.f32.xlu0 %v333
    %v335 = vpop.xlane.xlu0 %334
    %v336 = vsub.f32 %v327, %v332
    %v337 = vsub.f32 %v328, %v335
    %v338 = vmul.f32 %v336, 1.442695
    %v339 = vpow.pop %v338
    %v340 = vmul.f32 %v337, 1.442695
    %v341 = vpow.pop %v340
    %v342 = vsel %vm329, %v339, 0.0
    %343 = vadd.xlane.f32.xlu0 %v342
    %v344 = vpop.xlane.xlu0 %343
    %v345 = vsel %vm329, %v341, 0.0
    %346 = vadd.xlane.f32.xlu0 %v345
    %v347 = vpop.xlane.xlu0 %346
    %v348 = vrcp.pop %v344
    %v349 = vrcp.pop %v347
    %v350 = vmul.f32 %v339, %v348
    %v351 = vmul.f32 %v341, %v349
    %352 = vrot.lane.b32.xlu0 %v225, 64
    %v353 = vpop.permute.xlu0 %352
    %354 = vrot.lane.b32.xlu0 %v230, 64
    %v355 = vpop.permute.xlu0 %354
    %v359 = vsel %vm329, %v350, 0
    %v362 = vsel %vm329, %v351, 0
    %364 = vmatprep.subr.mxu0 0.0
    %365 = vmatpush1.msra.mxu0 %v353
    %366 = vmatprep.subr.mxu0 0.0
    %367 = vmatpush1.msra.mxu0 %v355
    %368 = vmatprep.subr.mxu0 0.0
    %369 = vmatpush1.msra.mxu0 0.0
    %370 = vmatprep.subr.mxu0 0.0
    %371 = vmatpush1.msra.mxu0 0.0
    %372 = vmatprep.subr.mxu0 0.0
    %373 = vmatpush1.msra.mxu0 0.0
    %374 = vmatprep.subr.mxu0 0.0
    %375 = vmatpush1.msra.mxu0 0.0
    %376 = vmatprep.subr.mxu0 0.0
    %377 = vmatpush1.msra.mxu0 0.0
    %378 = vmatprep.subr.mxu0 0.0
    %379 = vmatpush1.msra.mxu0 0.0
    %380 = vmatprep.subr.mxu0 0.0
    %381 = vmatpush1.msra.mxu0 0.0
    %382 = vmatprep.subr.mxu0 0.0
    %383 = vmatpush1.msra.mxu0 0.0
    %384 = vmatprep.subr.mxu0 0.0
    %385 = vmatpush1.msra.mxu0 0.0
    %386 = vmatprep.subr.mxu0 0.0
    %387 = vmatpush1.msra.mxu0 0.0
    %388 = vmatprep.subr.mxu0 0.0
    %389 = vmatpush1.msra.mxu0 0.0
    %390 = vmatprep.subr.mxu0 0.0
    %391 = vmatpush1.msra.mxu0 0.0
    %392 = vmatprep.subr.mxu0 0.0
    %393 = vmatpush1.msra.mxu0 0.0
    %394 = vmatprep.subr.mxu0 0.0
    %395 = vmatpush1.msra.mxu0 0.0
    %396 = vmatprep.subr.mxu0 0.0
    %397 = vmatpush1.msra.mxu0 0.0
    %398 = vmatprep.subr.mxu0 0.0
    %399 = vmatpush1.msra.mxu0 0.0
    %400 = vmatprep.subr.mxu0 0.0
    %401 = vmatpush1.msra.mxu0 0.0
    %402 = vmatprep.subr.mxu0 0.0
    %403 = vmatpush1.msra.mxu0 0.0
    %404 = vmatprep.subr.mxu0 0.0
    %405 = vmatpush1.msra.mxu0 0.0
    %406 = vmatprep.subr.mxu0 0.0
    %407 = vmatpush1.msra.mxu0 0.0
    %408 = vmatprep.subr.mxu0 0.0
    %409 = vmatpush1.msra.mxu0 0.0
    %410 = vmatprep.subr.mxu0 0.0
    %411 = vmatpush1.msra.mxu0 0.0
    %412 = vmatprep.subr.mxu0 0.0
    %413 = vmatpush1.msra.mxu0 0.0
    %414 = vmatprep.subr.mxu0 0.0
    %415 = vmatpush1.msra.mxu0 0.0
    %416 = vmatprep.subr.mxu0 0.0
    %417 = vmatpush1.msra.mxu0 0.0
    %418 = vmatprep.subr.mxu0 0.0
    %419 = vmatpush1.msra.mxu0 0.0
    %420 = vmatprep.subr.mxu0 0.0
    %421 = vmatpush1.msra.mxu0 0.0
    %422 = vmatprep.subr.mxu0 0.0
    %423 = vmatpush1.msra.mxu0 0.0
    %424 = vmatprep.subr.mxu0 0.0
    %425 = vmatpush1.msra.mxu0 0.0
    %426 = vmatprep.subr.mxu0 0.0
    %427 = vmatpush1.msra.mxu0 0.0
    %428 = vmatprep.mubr.f32.mxu0 0.0
    %429 = vmatmul.mubr.f32.gmra.mrb[0].mxu0 %v359
    %v430 = vpop.f32.mrb[0].mxu0
    %v431 = vadd.f32 0.0, %v430
    %v432 = vpop.f32.mrb[0].mxu0
    %433 = vmatprep.mubr.f32.mxu0 0.0
    %434 = vmatmul.mubr.f32.gmra.mrb[0].mxu0 %v362
    %v435 = vpop.f32.mrb[0].mxu0
    %v436 = vadd.f32 0.0, %v435
    %v437 = vpop.f32.mrb[0].mxu0
    %438 = vdwg.mxu0
    %439 = vrot.lane.b32.xlu0 %v233, 120
    %v440 = vpop.permute.xlu0 %439
    %441 = vrot.lane.b32.xlu0 %v234, 120
    %v442 = vpop.permute.xlu0 %441
    %443 = vrot.lane.b32.xlu0 %v225, 88
    %v444 = vpop.permute.xlu0 %443
    %445 = vrot.lane.b32.xlu0 %v230, 88
    %v446 = vpop.permute.xlu0 %445
    %v447 = vsel %vm241, %v440, 0
    %v449 = vsel %vm241, %v442, 0
    %v451 = vsel %vm241, %v444, 0
    %v453 = vsel %vm241, %v446, 0
    %455 = vmatprep.subr.mxu0 0.0
    %456 = vmatpush1.xpose.msra.mxu0 %v451
    %457 = vmatprep.subr.mxu0 0.0
    %458 = vmatpush1.xpose.msra.mxu0 %v453
    %459 = vmatprep.subr.mxu0 0.0
    %460 = vmatpush1.xpose.msra.mxu0 0.0
    %461 = vmatprep.subr.mxu0 0.0
    %462 = vmatpush1.xpose.msra.mxu0 0.0
    %463 = vmatprep.subr.mxu0 0.0
    %464 = vmatpush1.xpose.msra.mxu0 0.0
    %465 = vmatprep.subr.mxu0 0.0
    %466 = vmatpush1.xpose.msra.mxu0 0.0
    %467 = vmatprep.subr.mxu0 0.0
    %468 = vmatpush1.xpose.msra.mxu0 0.0
    %469 = vmatprep.subr.mxu0 0.0
    %470 = vmatpush1.xpose.msra.mxu0 0.0
    %471 = vmatprep.subr.mxu0 0.0
    %472 = vmatpush1.xpose.msra.mxu0 0.0
    %473 = vmatprep.subr.mxu0 0.0
    %474 = vmatpush1.xpose.msra.mxu0 0.0
    %475 = vmatprep.subr.mxu0 0.0
    %476 = vmatpush1.xpose.msra.mxu0 0.0
    %477 = vmatprep.subr.mxu0 0.0
    %478 = vmatpush1.xpose.msra.mxu0 0.0
    %479 = vmatprep.subr.mxu0 0.0
    %480 = vmatpush1.xpose.msra.mxu0 0.0
    %481 = vmatprep.subr.mxu0 0.0
    %482 = vmatpush1.xpose.msra.mxu0 0.0
    %483 = vmatprep.subr.mxu0 0.0
    %484 = vmatpush1.xpose.msra.mxu0 0.0
    %485 = vmatprep.subr.mxu0 0.0
    %486 = vmatpush1.xpose.msra.mxu0 0.0
    %487 = vmatprep.subr.mxu0 0.0
    %488 = vmatpush1.xpose.msra.mxu0 0.0
    %489 = vmatprep.subr.mxu0 0.0
    %490 = vmatpush1.xpose.msra.mxu0 0.0
    %491 = vmatprep.subr.mxu0 0.0
    %492 = vmatpush1.xpose.msra.mxu0 0.0
    %493 = vmatprep.subr.mxu0 0.0
    %494 = vmatpush1.xpose.msra.mxu0 0.0
    %495 = vmatprep.subr.mxu0 0.0
    %496 = vmatpush1.xpose.msra.mxu0 0.0
    %497 = vmatprep.subr.mxu0 0.0
    %498 = vmatpush1.xpose.msra.mxu0 0.0
    %499 = vmatprep.subr.mxu0 0.0
    %500 = vmatpush1.xpose.msra.mxu0 0.0
    %501 = vmatprep.subr.mxu0 0.0
    %502 = vmatpush1.xpose.msra.mxu0 0.0
    %503 = vmatprep.subr.mxu0 0.0
    %504 = vmatpush1.xpose.msra.mxu0 0.0
    %505 = vmatprep.subr.mxu0 0.0
    %506 = vmatpush1.xpose.msra.mxu0 0.0
    %507 = vmatprep.subr.mxu0 0.0
    %508 = vmatpush1.xpose.msra.mxu0 0.0
    %509 = vmatprep.subr.mxu0 0.0
    %510 = vmatpush1.xpose.msra.mxu0 0.0
    %511 = vmatprep.subr.mxu0 0.0
    %512 = vmatpush1.xpose.msra.mxu0 0.0
    %513 = vmatprep.subr.mxu0 0.0
    %514 = vmatpush1.xpose.msra.mxu0 0.0
    %515 = vmatprep.subr.mxu0 0.0
    %516 = vmatpush1.xpose.msra.mxu0 0.0
    %517 = vmatprep.subr.mxu0 0.0
    %518 = vmatpush1.xpose.msra.mxu0 0.0
    %519 = vmatprep.mubr.f32.mxu0 0.0
    %520 = vmatmul.mubr.f32.gmra.mrb[0].mxu0 %v447
    %v521 = vpop.f32.mrb[0].mxu0
    %v522 = vadd.f32 0.0, %v521
    %v523 = vpop.f32.mrb[0].mxu0
    %524 = vmatprep.mubr.f32.mxu0 0.0
    %525 = vmatmul.mubr.f32.gmra.mrb[0].mxu0 %v449
    %v526 = vpop.f32.mrb[0].mxu0
    %v527 = vadd.f32 0.0, %v526
    %v528 = vpop.f32.mrb[0].mxu0
    %529 = vdwg.mxu0
    %v530 = vsel %vm138, %v522, -1e+09
    %v531 = vsel %vm139, %v527, -1e+09
    %v532 = vsel %vm329, %v530, -inf
    %533 = vmax.xlane.f32.xlu0 %v532
    %v534 = vpop.xlane.xlu0 %533
    %v535 = vsel %vm329, %v531, -inf
    %536 = vmax.xlane.f32.xlu0 %v535
    %v537 = vpop.xlane.xlu0 %536
    %v538 = vsub.f32 %v530, %v534
    %v539 = vsub.f32 %v531, %v537
    %v540 = vmul.f32 %v538, 1.442695
    %v541 = vpow.pop %v540
    %v542 = vmul.f32 %v539, 1.442695
    %v543 = vpow.pop %v542
    %v544 = vsel %vm329, %v541, 0.0
    %545 = vadd.xlane.f32.xlu0 %v544
    %v546 = vpop.xlane.xlu0 %545
    %v547 = vsel %vm329, %v543, 0.0
    %548 = vadd.xlane.f32.xlu0 %v547
    %v549 = vpop.xlane.xlu0 %548
    %v550 = vrcp.pop %v546
    %v551 = vrcp.pop %v549
    %v552 = vmul.f32 %v541, %v550
    %v553 = vmul.f32 %v543, %v551
    %554 = vrot.lane.b32.xlu0 %v225, 56
    %v555 = vpop.permute.xlu0 %554
    %556 = vrot.lane.b32.xlu0 %v230, 56
    %v557 = vpop.permute.xlu0 %556
    %v561 = vsel %vm329, %v552, 0
    %v564 = vsel %vm329, %v553, 0
    %566 = vmatprep.subr.mxu0 0.0
    %567 = vmatpush1.msra.mxu0 %v555
    %568 = vmatprep.subr.mxu0 0.0
    %569 = vmatpush1.msra.mxu0 %v557
    %570 = vmatprep.subr.mxu0 0.0
    %571 = vmatpush1.msra.mxu0 0.0
    %572 = vmatprep.subr.mxu0 0.0
    %573 = vmatpush1.msra.mxu0 0.0
    %574 = vmatprep.subr.mxu0 0.0
    %575 = vmatpush1.msra.mxu0 0.0
    %576 = vmatprep.subr.mxu0 0.0
    %577 = vmatpush1.msra.mxu0 0.0
    %578 = vmatprep.subr.mxu0 0.0
    %579 = vmatpush1.msra.mxu0 0.0
    %580 = vmatprep.subr.mxu0 0.0
    %581 = vmatpush1.msra.mxu0 0.0
    %582 = vmatprep.subr.mxu0 0.0
    %583 = vmatpush1.msra.mxu0 0.0
    %584 = vmatprep.subr.mxu0 0.0
    %585 = vmatpush1.msra.mxu0 0.0
    %586 = vmatprep.subr.mxu0 0.0
    %587 = vmatpush1.msra.mxu0 0.0
    %588 = vmatprep.subr.mxu0 0.0
    %589 = vmatpush1.msra.mxu0 0.0
    %590 = vmatprep.subr.mxu0 0.0
    %591 = vmatpush1.msra.mxu0 0.0
    %592 = vmatprep.subr.mxu0 0.0
    %593 = vmatpush1.msra.mxu0 0.0
    %594 = vmatprep.subr.mxu0 0.0
    %595 = vmatpush1.msra.mxu0 0.0
    %596 = vmatprep.subr.mxu0 0.0
    %597 = vmatpush1.msra.mxu0 0.0
    %598 = vmatprep.subr.mxu0 0.0
    %599 = vmatpush1.msra.mxu0 0.0
    %600 = vmatprep.subr.mxu0 0.0
    %601 = vmatpush1.msra.mxu0 0.0
    %602 = vmatprep.subr.mxu0 0.0
    %603 = vmatpush1.msra.mxu0 0.0
    %604 = vmatprep.subr.mxu0 0.0
    %605 = vmatpush1.msra.mxu0 0.0
    %606 = vmatprep.subr.mxu0 0.0
    %607 = vmatpush1.msra.mxu0 0.0
    %608 = vmatprep.subr.mxu0 0.0
    %609 = vmatpush1.msra.mxu0 0.0
    %610 = vmatprep.subr.mxu0 0.0
    %611 = vmatpush1.msra.mxu0 0.0
    %612 = vmatprep.subr.mxu0 0.0
    %613 = vmatpush1.msra.mxu0 0.0
    %614 = vmatprep.subr.mxu0 0.0
    %615 = vmatpush1.msra.mxu0 0.0
    %616 = vmatprep.subr.mxu0 0.0
    %617 = vmatpush1.msra.mxu0 0.0
    %618 = vmatprep.subr.mxu0 0.0
    %619 = vmatpush1.msra.mxu0 0.0
    %620 = vmatprep.subr.mxu0 0.0
    %621 = vmatpush1.msra.mxu0 0.0
    %622 = vmatprep.subr.mxu0 0.0
    %623 = vmatpush1.msra.mxu0 0.0
    %624 = vmatprep.subr.mxu0 0.0
    %625 = vmatpush1.msra.mxu0 0.0
    %626 = vmatprep.subr.mxu0 0.0
    %627 = vmatpush1.msra.mxu0 0.0
    %628 = vmatprep.subr.mxu0 0.0
    %629 = vmatpush1.msra.mxu0 0.0
    %630 = vmatprep.mubr.f32.mxu0 0.0
    %631 = vmatmul.mubr.f32.gmra.mrb[0].mxu0 %v561
    %v632 = vpop.f32.mrb[0].mxu0
    %v633 = vadd.f32 0.0, %v632
    %v634 = vpop.f32.mrb[0].mxu0
    %635 = vmatprep.mubr.f32.mxu0 0.0
    %636 = vmatmul.mubr.f32.gmra.mrb[0].mxu0 %v564
    %v637 = vpop.f32.mrb[0].mxu0
    %v638 = vadd.f32 0.0, %v637
    %v639 = vpop.f32.mrb[0].mxu0
    %640 = vdwg.mxu0
    %641 = vrot.lane.b32.xlu0 %v233, 112
    %v642 = vpop.permute.xlu0 %641
    %643 = vrot.lane.b32.xlu0 %v234, 112
    %v644 = vpop.permute.xlu0 %643
    %645 = vrot.lane.b32.xlu0 %v225, 80
    %v646 = vpop.permute.xlu0 %645
    %647 = vrot.lane.b32.xlu0 %v230, 80
    %v648 = vpop.permute.xlu0 %647
    %v649 = vsel %vm241, %v642, 0
    %v651 = vsel %vm241, %v644, 0
    %v653 = vsel %vm241, %v646, 0
    %v655 = vsel %vm241, %v648, 0
    %657 = vmatprep.subr.mxu0 0.0
    %658 = vmatpush1.xpose.msra.mxu0 %v653
    %659 = vmatprep.subr.mxu0 0.0
    %660 = vmatpush1.xpose.msra.mxu0 %v655
    %661 = vmatprep.subr.mxu0 0.0
    %662 = vmatpush1.xpose.msra.mxu0 0.0
    %663 = vmatprep.subr.mxu0 0.0
    %664 = vmatpush1.xpose.msra.mxu0 0.0
    %665 = vmatprep.subr.mxu0 0.0
    %666 = vmatpush1.xpose.msra.mxu0 0.0
    %667 = vmatprep.subr.mxu0 0.0
    %668 = vmatpush1.xpose.msra.mxu0 0.0
    %669 = vmatprep.subr.mxu0 0.0
    %670 = vmatpush1.xpose.msra.mxu0 0.0
    %671 = vmatprep.subr.mxu0 0.0
    %672 = vmatpush1.xpose.msra.mxu0 0.0
    %673 = vmatprep.subr.mxu0 0.0
    %674 = vmatpush1.xpose.msra.mxu0 0.0
    %675 = vmatprep.subr.mxu0 0.0
    %676 = vmatpush1.xpose.msra.mxu0 0.0
    %677 = vmatprep.subr.mxu0 0.0
    %678 = vmatpush1.xpose.msra.mxu0 0.0
    %679 = vmatprep.subr.mxu0 0.0
    %680 = vmatpush1.xpose.msra.mxu0 0.0
    %681 = vmatprep.subr.mxu0 0.0
    %682 = vmatpush1.xpose.msra.mxu0 0.0
    %683 = vmatprep.subr.mxu0 0.0
    %684 = vmatpush1.xpose.msra.mxu0 0.0
    %685 = vmatprep.subr.mxu0 0.0
    %686 = vmatpush1.xpose.msra.mxu0 0.0
    %687 = vmatprep.subr.mxu0 0.0
    %688 = vmatpush1.xpose.msra.mxu0 0.0
    %689 = vmatprep.subr.mxu0 0.0
    %690 = vmatpush1.xpose.msra.mxu0 0.0
    %691 = vmatprep.subr.mxu0 0.0
    %692 = vmatpush1.xpose.msra.mxu0 0.0
    %693 = vmatprep.subr.mxu0 0.0
    %694 = vmatpush1.xpose.msra.mxu0 0.0
    %695 = vmatprep.subr.mxu0 0.0
    %696 = vmatpush1.xpose.msra.mxu0 0.0
    %697 = vmatprep.subr.mxu0 0.0
    %698 = vmatpush1.xpose.msra.mxu0 0.0
    %699 = vmatprep.subr.mxu0 0.0
    %700 = vmatpush1.xpose.msra.mxu0 0.0
    %701 = vmatprep.subr.mxu0 0.0
    %702 = vmatpush1.xpose.msra.mxu0 0.0
    %703 = vmatprep.subr.mxu0 0.0
    %704 = vmatpush1.xpose.msra.mxu0 0.0
    %705 = vmatprep.subr.mxu0 0.0
    %706 = vmatpush1.xpose.msra.mxu0 0.0
    %707 = vmatprep.subr.mxu0 0.0
    %708 = vmatpush1.xpose.msra.mxu0 0.0
    %709 = vmatprep.subr.mxu0 0.0
    %710 = vmatpush1.xpose.msra.mxu0 0.0
    %711 = vmatprep.subr.mxu0 0.0
    %712 = vmatpush1.xpose.msra.mxu0 0.0
    %713 = vmatprep.subr.mxu0 0.0
    %714 = vmatpush1.xpose.msra.mxu0 0.0
    %715 = vmatprep.subr.mxu0 0.0
    %716 = vmatpush1.xpose.msra.mxu0 0.0
    %717 = vmatprep.subr.mxu0 0.0
    %718 = vmatpush1.xpose.msra.mxu0 0.0
    %719 = vmatprep.subr.mxu0 0.0
    %720 = vmatpush1.xpose.msra.mxu0 0.0
    %721 = vmatprep.mubr.f32.mxu0 0.0
    %722 = vmatmul.mubr.f32.gmra.mrb[0].mxu0 %v649
    %v723 = vpop.f32.mrb[0].mxu0
    %v724 = vadd.f32 0.0, %v723
    %v725 = vpop.f32.mrb[0].mxu0
    %726 = vmatprep.mubr.f32.mxu0 0.0
    %727 = vmatmul.mubr.f32.gmra.mrb[0].mxu0 %v651
    %v728 = vpop.f32.mrb[0].mxu0
    %v729 = vadd.f32 0.0, %v728
    %v730 = vpop.f32.mrb[0].mxu0
    %731 = vdwg.mxu0
    %v732 = vsel %vm138, %v724, -1e+09
    %v733 = vsel %vm139, %v729, -1e+09
    %v734 = vsel %vm329, %v732, -inf
    %735 = vmax.xlane.f32.xlu0 %v734
    %v736 = vpop.xlane.xlu0 %735
    %v737 = vsel %vm329, %v733, -inf
    %738 = vmax.xlane.f32.xlu0 %v737
    %v739 = vpop.xlane.xlu0 %738
    %v740 = vsub.f32 %v732, %v736
    %v741 = vsub.f32 %v733, %v739
    %v742 = vmul.f32 %v740, 1.442695
    %v743 = vpow.pop %v742
    %v744 = vmul.f32 %v741, 1.442695
    %v745 = vpow.pop %v744
    %v746 = vsel %vm329, %v743, 0.0
    %747 = vadd.xlane.f32.xlu0 %v746
    %v748 = vpop.xlane.xlu0 %747
    %v749 = vsel %vm329, %v745, 0.0
    %750 = vadd.xlane.f32.xlu0 %v749
    %v751 = vpop.xlane.xlu0 %750
    %v752 = vrcp.pop %v748
    %v753 = vrcp.pop %v751
    %v754 = vmul.f32 %v743, %v752
    %v755 = vmul.f32 %v745, %v753
    %756 = vrot.lane.b32.xlu0 %v225, 48
    %v757 = vpop.permute.xlu0 %756
    %758 = vrot.lane.b32.xlu0 %v230, 48
    %v759 = vpop.permute.xlu0 %758
    %v763 = vsel %vm329, %v754, 0
    %v766 = vsel %vm329, %v755, 0
    %768 = vmatprep.subr.mxu0 0.0
    %769 = vmatpush1.msra.mxu0 %v757
    %770 = vmatprep.subr.mxu0 0.0
    %771 = vmatpush1.msra.mxu0 %v759
    %772 = vmatprep.subr.mxu0 0.0
    %773 = vmatpush1.msra.mxu0 0.0
    %774 = vmatprep.subr.mxu0 0.0
    %775 = vmatpush1.msra.mxu0 0.0
    %776 = vmatprep.subr.mxu0 0.0
    %777 = vmatpush1.msra.mxu0 0.0
    %778 = vmatprep.subr.mxu0 0.0
    %779 = vmatpush1.msra.mxu0 0.0
    %780 = vmatprep.subr.mxu0 0.0
    %781 = vmatpush1.msra.mxu0 0.0
    %782 = vmatprep.subr.mxu0 0.0
    %783 = vmatpush1.msra.mxu0 0.0
    %784 = vmatprep.subr.mxu0 0.0
    %785 = vmatpush1.msra.mxu0 0.0
    %786 = vmatprep.subr.mxu0 0.0
    %787 = vmatpush1.msra.mxu0 0.0
    %788 = vmatprep.subr.mxu0 0.0
    %789 = vmatpush1.msra.mxu0 0.0
    %790 = vmatprep.subr.mxu0 0.0
    %791 = vmatpush1.msra.mxu0 0.0
    %792 = vmatprep.subr.mxu0 0.0
    %793 = vmatpush1.msra.mxu0 0.0
    %794 = vmatprep.subr.mxu0 0.0
    %795 = vmatpush1.msra.mxu0 0.0
    %796 = vmatprep.subr.mxu0 0.0
    %797 = vmatpush1.msra.mxu0 0.0
    %798 = vmatprep.subr.mxu0 0.0
    %799 = vmatpush1.msra.mxu0 0.0
    %800 = vmatprep.subr.mxu0 0.0
    %801 = vmatpush1.msra.mxu0 0.0
    %802 = vmatprep.subr.mxu0 0.0
    %803 = vmatpush1.msra.mxu0 0.0
    %804 = vmatprep.subr.mxu0 0.0
    %805 = vmatpush1.msra.mxu0 0.0
    %806 = vmatprep.subr.mxu0 0.0
    %807 = vmatpush1.msra.mxu0 0.0
    %808 = vmatprep.subr.mxu0 0.0
    %809 = vmatpush1.msra.mxu0 0.0
    %810 = vmatprep.subr.mxu0 0.0
    %811 = vmatpush1.msra.mxu0 0.0
    %812 = vmatprep.subr.mxu0 0.0
    %813 = vmatpush1.msra.mxu0 0.0
    %814 = vmatprep.subr.mxu0 0.0
    %815 = vmatpush1.msra.mxu0 0.0
    %816 = vmatprep.subr.mxu0 0.0
    %817 = vmatpush1.msra.mxu0 0.0
    %818 = vmatprep.subr.mxu0 0.0
    %819 = vmatpush1.msra.mxu0 0.0
    %820 = vmatprep.subr.mxu0 0.0
    %821 = vmatpush1.msra.mxu0 0.0
    %822 = vmatprep.subr.mxu0 0.0
    %823 = vmatpush1.msra.mxu0 0.0
    %824 = vmatprep.subr.mxu0 0.0
    %825 = vmatpush1.msra.mxu0 0.0
    %826 = vmatprep.subr.mxu0 0.0
    %827 = vmatpush1.msra.mxu0 0.0
    %828 = vmatprep.subr.mxu0 0.0
    %829 = vmatpush1.msra.mxu0 0.0
    %830 = vmatprep.subr.mxu0 0.0
    %831 = vmatpush1.msra.mxu0 0.0
    %832 = vmatprep.mubr.f32.mxu0 0.0
    %833 = vmatmul.mubr.f32.gmra.mrb[0].mxu0 %v763
    %v834 = vpop.f32.mrb[0].mxu0
    %v835 = vadd.f32 0.0, %v834
    %v836 = vpop.f32.mrb[0].mxu0
    %837 = vmatprep.mubr.f32.mxu0 0.0
    %838 = vmatmul.mubr.f32.gmra.mrb[0].mxu0 %v766
    %v839 = vpop.f32.mrb[0].mxu0
    %v840 = vadd.f32 0.0, %v839
    %v841 = vpop.f32.mrb[0].mxu0
    %842 = vdwg.mxu0
    %843 = vrot.lane.b32.xlu0 %v233, 104
    %v844 = vpop.permute.xlu0 %843
    %845 = vrot.lane.b32.xlu0 %v234, 104
    %v846 = vpop.permute.xlu0 %845
    %847 = vrot.lane.b32.xlu0 %v225, 72
    %v848 = vpop.permute.xlu0 %847
    %849 = vrot.lane.b32.xlu0 %v230, 72
    %v850 = vpop.permute.xlu0 %849
    %v851 = vsel %vm241, %v844, 0
    %v853 = vsel %vm241, %v846, 0
    %v855 = vsel %vm241, %v848, 0
    %v857 = vsel %vm241, %v850, 0
    %859 = vmatprep.subr.mxu0 0.0
    %860 = vmatpush1.xpose.msra.mxu0 %v855
    %861 = vmatprep.subr.mxu0 0.0
    %862 = vmatpush1.xpose.msra.mxu0 %v857
    %863 = vmatprep.subr.mxu0 0.0
    %864 = vmatpush1.xpose.msra.mxu0 0.0
    %865 = vmatprep.subr.mxu0 0.0
    %866 = vmatpush1.xpose.msra.mxu0 0.0
    %867 = vmatprep.subr.mxu0 0.0
    %868 = vmatpush1.xpose.msra.mxu0 0.0
    %869 = vmatprep.subr.mxu0 0.0
    %870 = vmatpush1.xpose.msra.mxu0 0.0
    %871 = vmatprep.subr.mxu0 0.0
    %872 = vmatpush1.xpose.msra.mxu0 0.0
    %873 = vmatprep.subr.mxu0 0.0
    %874 = vmatpush1.xpose.msra.mxu0 0.0
    %875 = vmatprep.subr.mxu0 0.0
    %876 = vmatpush1.xpose.msra.mxu0 0.0
    %877 = vmatprep.subr.mxu0 0.0
    %878 = vmatpush1.xpose.msra.mxu0 0.0
    %879 = vmatprep.subr.mxu0 0.0
    %880 = vmatpush1.xpose.msra.mxu0 0.0
    %881 = vmatprep.subr.mxu0 0.0
    %882 = vmatpush1.xpose.msra.mxu0 0.0
    %883 = vmatprep.subr.mxu0 0.0
    %884 = vmatpush1.xpose.msra.mxu0 0.0
    %885 = vmatprep.subr.mxu0 0.0
    %886 = vmatpush1.xpose.msra.mxu0 0.0
    %887 = vmatprep.subr.mxu0 0.0
    %888 = vmatpush1.xpose.msra.mxu0 0.0
    %889 = vmatprep.subr.mxu0 0.0
    %890 = vmatpush1.xpose.msra.mxu0 0.0
    %891 = vmatprep.subr.mxu0 0.0
    %892 = vmatpush1.xpose.msra.mxu0 0.0
    %893 = vmatprep.subr.mxu0 0.0
    %894 = vmatpush1.xpose.msra.mxu0 0.0
    %895 = vmatprep.subr.mxu0 0.0
    %896 = vmatpush1.xpose.msra.mxu0 0.0
    %897 = vmatprep.subr.mxu0 0.0
    %898 = vmatpush1.xpose.msra.mxu0 0.0
    %899 = vmatprep.subr.mxu0 0.0
    %900 = vmatpush1.xpose.msra.mxu0 0.0
    %901 = vmatprep.subr.mxu0 0.0
    %902 = vmatpush1.xpose.msra.mxu0 0.0
    %903 = vmatprep.subr.mxu0 0.0
    %904 = vmatpush1.xpose.msra.mxu0 0.0
    %905 = vmatprep.subr.mxu0 0.0
    %906 = vmatpush1.xpose.msra.mxu0 0.0
    %907 = vmatprep.subr.mxu0 0.0
    %908 = vmatpush1.xpose.msra.mxu0 0.0
    %909 = vmatprep.subr.mxu0 0.0
    %910 = vmatpush1.xpose.msra.mxu0 0.0
    %911 = vmatprep.subr.mxu0 0.0
    %912 = vmatpush1.xpose.msra.mxu0 0.0
    %913 = vmatprep.subr.mxu0 0.0
    %914 = vmatpush1.xpose.msra.mxu0 0.0
    %915 = vmatprep.subr.mxu0 0.0
    %916 = vmatpush1.xpose.msra.mxu0 0.0
    %917 = vmatprep.subr.mxu0 0.0
    %918 = vmatpush1.xpose.msra.mxu0 0.0
    %919 = vmatprep.subr.mxu0 0.0
    %920 = vmatpush1.xpose.msra.mxu0 0.0
    %921 = vmatprep.subr.mxu0 0.0
    %922 = vmatpush1.xpose.msra.mxu0 0.0
    %923 = vmatprep.mubr.f32.mxu0 0.0
    %924 = vmatmul.mubr.f32.gmra.mrb[0].mxu0 %v851
    %v925 = vpop.f32.mrb[0].mxu0
    %v926 = vadd.f32 0.0, %v925
    %v927 = vpop.f32.mrb[0].mxu0
    %928 = vmatprep.mubr.f32.mxu0 0.0
    %929 = vmatmul.mubr.f32.gmra.mrb[0].mxu0 %v853
    %v930 = vpop.f32.mrb[0].mxu0
    %v931 = vadd.f32 0.0, %v930
    %v932 = vpop.f32.mrb[0].mxu0
    %933 = vdwg.mxu0
    %v934 = vsel %vm138, %v926, -1e+09
    %v935 = vsel %vm139, %v931, -1e+09
    %v936 = vsel %vm329, %v934, -inf
    %937 = vmax.xlane.f32.xlu0 %v936
    %v938 = vpop.xlane.xlu0 %937
    %v939 = vsel %vm329, %v935, -inf
    %940 = vmax.xlane.f32.xlu0 %v939
    %v941 = vpop.xlane.xlu0 %940
    %v942 = vsub.f32 %v934, %v938
    %v943 = vsub.f32 %v935, %v941
    %v944 = vmul.f32 %v942, 1.442695
    %v945 = vpow.pop %v944
    %v946 = vmul.f32 %v943, 1.442695
    %v947 = vpow.pop %v946
    %v948 = vsel %vm329, %v945, 0.0
    %949 = vadd.xlane.f32.xlu0 %v948
    %v950 = vpop.xlane.xlu0 %949
    %v951 = vsel %vm329, %v947, 0.0
    %952 = vadd.xlane.f32.xlu0 %v951
    %v953 = vpop.xlane.xlu0 %952
    %v954 = vrcp.pop %v950
    %v955 = vrcp.pop %v953
    %v956 = vmul.f32 %v945, %v954
    %v957 = vmul.f32 %v947, %v955
    %958 = vrot.lane.b32.xlu0 %v225, 40
    %v959 = vpop.permute.xlu0 %958
    %960 = vrot.lane.b32.xlu0 %v230, 40
    %v961 = vpop.permute.xlu0 %960
    %v965 = vsel %vm329, %v956, 0
    %v968 = vsel %vm329, %v957, 0
    %970 = vmatprep.subr.mxu0 0.0
    %971 = vmatpush1.msra.mxu0 %v959
    %972 = vmatprep.subr.mxu0 0.0
    %973 = vmatpush1.msra.mxu0 %v961
    %974 = vmatprep.subr.mxu0 0.0
    %975 = vmatpush1.msra.mxu0 0.0
    %976 = vmatprep.subr.mxu0 0.0
    %977 = vmatpush1.msra.mxu0 0.0
    %978 = vmatprep.subr.mxu0 0.0
    %979 = vmatpush1.msra.mxu0 0.0
    %980 = vmatprep.subr.mxu0 0.0
    %981 = vmatpush1.msra.mxu0 0.0
    %982 = vmatprep.subr.mxu0 0.0
    %983 = vmatpush1.msra.mxu0 0.0
    %984 = vmatprep.subr.mxu0 0.0
    %985 = vmatpush1.msra.mxu0 0.0
    %986 = vmatprep.subr.mxu0 0.0
    %987 = vmatpush1.msra.mxu0 0.0
    %988 = vmatprep.subr.mxu0 0.0
    %989 = vmatpush1.msra.mxu0 0.0
    %990 = vmatprep.subr.mxu0 0.0
    %991 = vmatpush1.msra.mxu0 0.0
    %992 = vmatprep.subr.mxu0 0.0
    %993 = vmatpush1.msra.mxu0 0.0
    %994 = vmatprep.subr.mxu0 0.0
    %995 = vmatpush1.msra.mxu0 0.0
    %996 = vmatprep.subr.mxu0 0.0
    %997 = vmatpush1.msra.mxu0 0.0
    %998 = vmatprep.subr.mxu0 0.0
    %999 = vmatpush1.msra.mxu0 0.0
    %1000 = vmatprep.subr.mxu0 0.0
    %1001 = vmatpush1.msra.mxu0 0.0
    %1002 = vmatprep.subr.mxu0 0.0
    %1003 = vmatpush1.msra.mxu0 0.0
    %1004 = vmatprep.subr.mxu0 0.0
    %1005 = vmatpush1.msra.mxu0 0.0
    %1006 = vmatprep.subr.mxu0 0.0
    %1007 = vmatpush1.msra.mxu0 0.0
    %1008 = vmatprep.subr.mxu0 0.0
    %1009 = vmatpush1.msra.mxu0 0.0
    %1010 = vmatprep.subr.mxu0 0.0
    %1011 = vmatpush1.msra.mxu0 0.0
    %1012 = vmatprep.subr.mxu0 0.0
    %1013 = vmatpush1.msra.mxu0 0.0
    %1014 = vmatprep.subr.mxu0 0.0
    %1015 = vmatpush1.msra.mxu0 0.0
    %1016 = vmatprep.subr.mxu0 0.0
    %1017 = vmatpush1.msra.mxu0 0.0
    %1018 = vmatprep.subr.mxu0 0.0
    %1019 = vmatpush1.msra.mxu0 0.0
    %1020 = vmatprep.subr.mxu0 0.0
    %1021 = vmatpush1.msra.mxu0 0.0
    %1022 = vmatprep.subr.mxu0 0.0
    %1023 = vmatpush1.msra.mxu0 0.0
    %1024 = vmatprep.subr.mxu0 0.0
    %1025 = vmatpush1.msra.mxu0 0.0
    %1026 = vmatprep.subr.mxu0 0.0
    %1027 = vmatpush1.msra.mxu0 0.0
    %1028 = vmatprep.subr.mxu0 0.0
    %1029 = vmatpush1.msra.mxu0 0.0
    %1030 = vmatprep.subr.mxu0 0.0
    %1031 = vmatpush1.msra.mxu0 0.0
    %1032 = vmatprep.subr.mxu0 0.0
    %1033 = vmatpush1.msra.mxu0 0.0
    %1034 = vmatprep.mubr.f32.mxu0 0.0
    %1035 = vmatmul.mubr.f32.gmra.mrb[0].mxu0 %v965
    %v1036 = vpop.f32.mrb[0].mxu0
    %v1037 = vadd.f32 0.0, %v1036
    %v1038 = vpop.f32.mrb[0].mxu0
    %1039 = vmatprep.mubr.f32.mxu0 0.0
    %1040 = vmatmul.mubr.f32.gmra.mrb[0].mxu0 %v968
    %v1041 = vpop.f32.mrb[0].mxu0
    %v1042 = vadd.f32 0.0, %v1041
    %v1043 = vpop.f32.mrb[0].mxu0
    %1044 = vdwg.mxu0
    %1047 = vrot.lane.b32.xlu0 %v633, 8
    %v1048 = vpop.permute.xlu0 %1047
    %1049 = vrot.lane.b32.xlu0 %v638, 8
    %v1050 = vpop.permute.xlu0 %1049
    %1055 = vrot.lane.b32.xlu0 %v835, 16
    %v1056 = vpop.permute.xlu0 %1055
    %1057 = vrot.lane.b32.xlu0 %v840, 16
    %v1058 = vpop.permute.xlu0 %1057
    %1063 = vrot.lane.b32.xlu0 %v1037, 24
    %v1064 = vpop.permute.xlu0 %1063
    %1065 = vrot.lane.b32.xlu0 %v1042, 24
    %v1066 = vpop.permute.xlu0 %1065
    %v1069 = vsel %vm241, %v431, %v1048
    %v1070 = vsel %vm241, %v436, %v1050
    %v1071 = vsel %vm329, %v1069, %v1056
    %v1072 = vsel %vm329, %v1070, %v1058
    %vm1073 = vcmask 195584
    %v1074 = vsel %vm1073, %v1071, %v1064
    %v1075 = vsel %vm1073, %v1072, %v1066
    %v1076 = vld [vmem:[%s6] sm:$0xff]
    %v1077 = vld [vmem:[%s6 + $0x8] sm:$0xff]
    %v1078 = vld [vmem:[%s6 + $0x10] sm:$0xff]
    %v1079 = vld [vmem:[%s6 + $0x18] sm:$0xff]
    %v1080 = vlaneseq
    %v1081 = vshrl.u32 %v1080, 7
    %v1082 = vsub.s32 0, %v1081
    %v1083 = vrot.slane %v118, %v1082
    %v1085 = vsel %vm151, %v1074, 0
    %v1088 = vsel %vm151, %v1075, 0
    %1090 = vmatprep.subr.mxu0 0.0
    %1091 = vmatpush1.msra.mxu0 %v1076
    %1092 = vmatprep.subr.mxu0 0.0
    %1093 = vmatpush1.msra.mxu0 %v1077
    %1094 = vmatprep.subr.mxu0 0.0
    %1095 = vmatpush1.msra.mxu0 %v1078
    %1096 = vmatprep.subr.mxu0 0.0
    %1097 = vmatpush1.msra.mxu0 %v1079
    %1098 = vmatprep.subr.mxu0 0.0
    %1099 = vmatpush1.msra.mxu0 0.0
    %1100 = vmatprep.subr.mxu0 0.0
    %1101 = vmatpush1.msra.mxu0 0.0
    %1102 = vmatprep.subr.mxu0 0.0
    %1103 = vmatpush1.msra.mxu0 0.0
    %1104 = vmatprep.subr.mxu0 0.0
    %1105 = vmatpush1.msra.mxu0 0.0
    %1106 = vmatprep.subr.mxu0 0.0
    %1107 = vmatpush1.msra.mxu0 0.0
    %1108 = vmatprep.subr.mxu0 0.0
    %1109 = vmatpush1.msra.mxu0 0.0
    %1110 = vmatprep.subr.mxu0 0.0
    %1111 = vmatpush1.msra.mxu0 0.0
    %1112 = vmatprep.subr.mxu0 0.0
    %1113 = vmatpush1.msra.mxu0 0.0
    %1114 = vmatprep.subr.mxu0 0.0
    %1115 = vmatpush1.msra.mxu0 0.0
    %1116 = vmatprep.subr.mxu0 0.0
    %1117 = vmatpush1.msra.mxu0 0.0
    %1118 = vmatprep.subr.mxu0 0.0
    %1119 = vmatpush1.msra.mxu0 0.0
    %1120 = vmatprep.subr.mxu0 0.0
    %1121 = vmatpush1.msra.mxu0 0.0
    %1122 = vmatprep.subr.mxu0 0.0
    %1123 = vmatpush1.msra.mxu0 0.0
    %1124 = vmatprep.subr.mxu0 0.0
    %1125 = vmatpush1.msra.mxu0 0.0
    %1126 = vmatprep.subr.mxu0 0.0
    %1127 = vmatpush1.msra.mxu0 0.0
    %1128 = vmatprep.subr.mxu0 0.0
    %1129 = vmatpush1.msra.mxu0 0.0
    %1130 = vmatprep.subr.mxu0 0.0
    %1131 = vmatpush1.msra.mxu0 0.0
    %1132 = vmatprep.subr.mxu0 0.0
    %1133 = vmatpush1.msra.mxu0 0.0
    %1134 = vmatprep.subr.mxu0 0.0
    %1135 = vmatpush1.msra.mxu0 0.0
    %1136 = vmatprep.subr.mxu0 0.0
    %1137 = vmatpush1.msra.mxu0 0.0
    %1138 = vmatprep.subr.mxu0 0.0
    %1139 = vmatpush1.msra.mxu0 0.0
    %1140 = vmatprep.subr.mxu0 0.0
    %1141 = vmatpush1.msra.mxu0 0.0
    %1142 = vmatprep.subr.mxu0 0.0
    %1143 = vmatpush1.msra.mxu0 0.0
    %1144 = vmatprep.subr.mxu0 0.0
    %1145 = vmatpush1.msra.mxu0 0.0
    %1146 = vmatprep.subr.mxu0 0.0
    %1147 = vmatpush1.msra.mxu0 0.0
    %1148 = vmatprep.subr.mxu0 0.0
    %1149 = vmatpush1.msra.mxu0 0.0
    %1150 = vmatprep.subr.mxu0 0.0
    %1151 = vmatpush1.msra.mxu0 0.0
    %1152 = vmatprep.subr.mxu0 0.0
    %1153 = vmatpush1.msra.mxu0 0.0
    %1154 = vmatprep.mubr.f32.mxu0 0.0
    %1155 = vmatmul.mubr.f32.gmra.mrb[0].mxu0 %v1085
    %v1156 = vpop.f32.mrb[0].mxu0
    %v1157 = vadd.f32 %v1083, %v1156
    %v1158 = vpop.f32.mrb[0].mxu0
    %1159 = vmatprep.mubr.f32.mxu0 0.0
    %1160 = vmatmul.mubr.f32.gmra.mrb[0].mxu0 %v1088
    %v1161 = vpop.f32.mrb[0].mxu0
    %v1162 = vadd.f32 %v1083, %v1161
    %v1163 = vpop.f32.mrb[0].mxu0
    %1164 = vdwg.mxu0
    %v1165 = vadd.f32 %v1157, %v116
    %v1166 = vadd.f32 %v1162, %v117
    %v1167 = vsel %vm151, %v1165, 0.0
    %1168 = vadd.xlane.f32.xlu0 %v1167
    %v1169 = vpop.xlane.xlu0 %1168
    %v1170 = vsel %vm151, %v1166, 0.0
    %1171 = vadd.xlane.f32.xlu0 %v1170
    %v1172 = vpop.xlane.xlu0 %1171
    %v1173 = vrcp.pop 32.0
    %v1174 = vmul.f32 %v1169, %v1173
    %v1175 = vmul.f32 %v1172, %v1173
    %v1176 = vsub.f32 %v1165, %v1174
    %v1177 = vsub.f32 %v1166, %v1175
    %v1178 = vmul.f32 %v1176, %v1176
    %v1179 = vmul.f32 %v1177, %v1177
    %v1180 = vsel %vm151, %v1178, 0.0
    %1181 = vadd.xlane.f32.xlu0 %v1180
    %v1182 = vpop.xlane.xlu0 %1181
    %v1183 = vsel %vm151, %v1179, 0.0
    %1184 = vadd.xlane.f32.xlu0 %v1183
    %v1185 = vpop.xlane.xlu0 %1184
    %v1186 = vmul.f32 %v1182, %v1173
    %v1187 = vmul.f32 %v1185, %v1173
    %v1188 = vadd.f32 %v1186, 1e-12
    %v1189 = vadd.f32 %v1187, 1e-12
    %v1190 = vrsqrt.pop %v1188
    %v1191 = vrsqrt.pop %v1189
    %v1192 = vmul.f32 %v1176, %v1190
    %v1193 = vmul.f32 %v1177, %v1191
    %v1194 = vlaneseq
    %v1195 = vshrl.u32 %v1194, 7
    %v1196 = vsub.s32 1, %v1195
    %v1197 = vrot.slane %v118, %v1196
    %v1198 = vmul.f32 %v1192, %v1197
    %v1199 = vmul.f32 %v1193, %v1197
    %v1200 = vlaneseq
    %v1201 = vshrl.u32 %v1200, 7
    %v1202 = vsub.s32 2, %v1201
    %v1203 = vrot.slane %v118, %v1202
    %v1204 = vadd.f32 %v1198, %v1203
    %v1205 = vadd.f32 %v1199, %v1203
    %v1206 = vld [vmem:[%s7] sm:$0xff]
    %v1207 = vld [vmem:[%s7 + $0x8] sm:$0xff]
    %v1208 = vld [vmem:[%s7 + $0x10] sm:$0xff]
    %v1209 = vld [vmem:[%s7 + $0x18] sm:$0xff]
    %v1210 = vlaneseq
    %v1211 = vshrl.u32 %v1210, 7
    %v1212 = vsub.s32 3, %v1211
    %v1213 = vrot.slane %v118, %v1212
    %v1215 = vsel %vm151, %v1204, 0
    %v1218 = vsel %vm151, %v1205, 0
    %1220 = vmatprep.subr.mxu0 0.0
    %1221 = vmatpush1.msra.mxu0 %v1206
    %1222 = vmatprep.subr.mxu0 0.0
    %1223 = vmatpush1.msra.mxu0 %v1207
    %1224 = vmatprep.subr.mxu0 0.0
    %1225 = vmatpush1.msra.mxu0 %v1208
    %1226 = vmatprep.subr.mxu0 0.0
    %1227 = vmatpush1.msra.mxu0 %v1209
    %1228 = vmatprep.subr.mxu0 0.0
    %1229 = vmatpush1.msra.mxu0 0.0
    %1230 = vmatprep.subr.mxu0 0.0
    %1231 = vmatpush1.msra.mxu0 0.0
    %1232 = vmatprep.subr.mxu0 0.0
    %1233 = vmatpush1.msra.mxu0 0.0
    %1234 = vmatprep.subr.mxu0 0.0
    %1235 = vmatpush1.msra.mxu0 0.0
    %1236 = vmatprep.subr.mxu0 0.0
    %1237 = vmatpush1.msra.mxu0 0.0
    %1238 = vmatprep.subr.mxu0 0.0
    %1239 = vmatpush1.msra.mxu0 0.0
    %1240 = vmatprep.subr.mxu0 0.0
    %1241 = vmatpush1.msra.mxu0 0.0
    %1242 = vmatprep.subr.mxu0 0.0
    %1243 = vmatpush1.msra.mxu0 0.0
    %1244 = vmatprep.subr.mxu0 0.0
    %1245 = vmatpush1.msra.mxu0 0.0
    %1246 = vmatprep.subr.mxu0 0.0
    %1247 = vmatpush1.msra.mxu0 0.0
    %1248 = vmatprep.subr.mxu0 0.0
    %1249 = vmatpush1.msra.mxu0 0.0
    %1250 = vmatprep.subr.mxu0 0.0
    %1251 = vmatpush1.msra.mxu0 0.0
    %1252 = vmatprep.subr.mxu0 0.0
    %1253 = vmatpush1.msra.mxu0 0.0
    %1254 = vmatprep.subr.mxu0 0.0
    %1255 = vmatpush1.msra.mxu0 0.0
    %1256 = vmatprep.subr.mxu0 0.0
    %1257 = vmatpush1.msra.mxu0 0.0
    %1258 = vmatprep.subr.mxu0 0.0
    %1259 = vmatpush1.msra.mxu0 0.0
    %1260 = vmatprep.subr.mxu0 0.0
    %1261 = vmatpush1.msra.mxu0 0.0
    %1262 = vmatprep.subr.mxu0 0.0
    %1263 = vmatpush1.msra.mxu0 0.0
    %1264 = vmatprep.subr.mxu0 0.0
    %1265 = vmatpush1.msra.mxu0 0.0
    %1266 = vmatprep.subr.mxu0 0.0
    %1267 = vmatpush1.msra.mxu0 0.0
    %1268 = vmatprep.subr.mxu0 0.0
    %1269 = vmatpush1.msra.mxu0 0.0
    %1270 = vmatprep.subr.mxu0 0.0
    %1271 = vmatpush1.msra.mxu0 0.0
    %1272 = vmatprep.subr.mxu0 0.0
    %1273 = vmatpush1.msra.mxu0 0.0
    %1274 = vmatprep.subr.mxu0 0.0
    %1275 = vmatpush1.msra.mxu0 0.0
    %1276 = vmatprep.subr.mxu0 0.0
    %1277 = vmatpush1.msra.mxu0 0.0
    %1278 = vmatprep.subr.mxu0 0.0
    %1279 = vmatpush1.msra.mxu0 0.0
    %1280 = vmatprep.subr.mxu0 0.0
    %1281 = vmatpush1.msra.mxu0 0.0
    %1282 = vmatprep.subr.mxu0 0.0
    %1283 = vmatpush1.msra.mxu0 0.0
    %1284 = vmatprep.mubr.f32.mxu0 0.0
    %1285 = vmatmul.mubr.f32.gmra.mrb[0].mxu0 %v1215
    %v1286 = vpop.f32.mrb[0].mxu0
    %v1287 = vadd.f32 %v1213, %v1286
    %v1288 = vpop.f32.mrb[0].mxu0
    %1289 = vmatprep.mubr.f32.mxu0 0.0
    %1290 = vmatmul.mubr.f32.gmra.mrb[0].mxu0 %v1218
    %v1291 = vpop.f32.mrb[0].mxu0
    %v1292 = vadd.f32 %v1213, %v1291
    %v1293 = vpop.f32.mrb[0].mxu0
    %1294 = vdwg.mxu0
    %v1295 = vmul.f32 %v1287, 0.5
    %v1296 = vmul.f32 %v1292, 0.5
    %v1297 = vrcp.pop 1.4142135
    %v1298 = vmul.f32 %v1287, %v1297
    %v1299 = vmul.f32 %v1292, %v1297
    %v1300 = verf.f32.pop %v1298
    %v1301 = verf.f32.pop %v1299
    %v1302 = vadd.f32 %v1300, 1.0
    %v1303 = vadd.f32 %v1301, 1.0
    %v1304 = vmul.f32 %v1295, %v1302
    %v1305 = vmul.f32 %v1296, %v1303
    %v1306 = vld [vmem:[%s8] sm:$0xff]
    %v1307 = vld [vmem:[%s8 + $0x8] sm:$0xff]
    %v1308 = vld [vmem:[%s8 + $0x10] sm:$0xff]
    %v1309 = vld [vmem:[%s8 + $0x18] sm:$0xff]
    %v1310 = vld [vmem:[%s8 + $0x20] sm:$0xff]
    %v1311 = vld [vmem:[%s8 + $0x28] sm:$0xff]
    %v1312 = vld [vmem:[%s8 + $0x30] sm:$0xff]
    %v1313 = vld [vmem:[%s8 + $0x38] sm:$0xff]
    %v1314 = vlaneseq
    %v1315 = vshrl.u32 %v1314, 7
    %v1316 = vsub.s32 4, %v1315
    %v1317 = vrot.slane %v118, %v1316
    %vm1318 = vcmask 523264
    %v1320 = vsel %vm1318, %v1304, 0
    %v1323 = vsel %vm1318, %v1305, 0
    %1325 = vmatprep.subr.mxu0 0.0
    %1326 = vmatpush1.msra.mxu0 %v1306
    %1327 = vmatprep.subr.mxu0 0.0
    %1328 = vmatpush1.msra.mxu0 %v1307
    %1329 = vmatprep.subr.mxu0 0.0
    %1330 = vmatpush1.msra.mxu0 %v1308
    %1331 = vmatprep.subr.mxu0 0.0
    %1332 = vmatpush1.msra.mxu0 %v1309
    %1333 = vmatprep.subr.mxu0 0.0
    %1334 = vmatpush1.msra.mxu0 %v1310
    %1335 = vmatprep.subr.mxu0 0.0
    %1336 = vmatpush1.msra.mxu0 %v1311
    %1337 = vmatprep.subr.mxu0 0.0
    %1338 = vmatpush1.msra.mxu0 %v1312
    %1339 = vmatprep.subr.mxu0 0.0
    %1340 = vmatpush1.msra.mxu0 %v1313
    %1341 = vmatprep.subr.mxu0 0.0
    %1342 = vmatpush1.msra.mxu0 0.0
    %1343 = vmatprep.subr.mxu0 0.0
    %1344 = vmatpush1.msra.mxu0 0.0
    %1345 = vmatprep.subr.mxu0 0.0
    %1346 = vmatpush1.msra.mxu0 0.0
    %1347 = vmatprep.subr.mxu0 0.0
    %1348 = vmatpush1.msra.mxu0 0.0
    %1349 = vmatprep.subr.mxu0 0.0
    %1350 = vmatpush1.msra.mxu0 0.0
    %1351 = vmatprep.subr.mxu0 0.0
    %1352 = vmatpush1.msra.mxu0 0.0
    %1353 = vmatprep.subr.mxu0 0.0
    %1354 = vmatpush1.msra.mxu0 0.0
    %1355 = vmatprep.subr.mxu0 0.0
    %1356 = vmatpush1.msra.mxu0 0.0
    %1357 = vmatprep.subr.mxu0 0.0
    %1358 = vmatpush1.msra.mxu0 0.0
    %1359 = vmatprep.subr.mxu0 0.0
    %1360 = vmatpush1.msra.mxu0 0.0
    %1361 = vmatprep.subr.mxu0 0.0
    %1362 = vmatpush1.msra.mxu0 0.0
    %1363 = vmatprep.subr.mxu0 0.0
    %1364 = vmatpush1.msra.mxu0 0.0
    %1365 = vmatprep.subr.mxu0 0.0
    %1366 = vmatpush1.msra.mxu0 0.0
    %1367 = vmatprep.subr.mxu0 0.0
    %1368 = vmatpush1.msra.mxu0 0.0
    %1369 = vmatprep.subr.mxu0 0.0
    %1370 = vmatpush1.msra.mxu0 0.0
    %1371 = vmatprep.subr.mxu0 0.0
    %1372 = vmatpush1.msra.mxu0 0.0
    %1373 = vmatprep.subr.mxu0 0.0
    %1374 = vmatpush1.msra.mxu0 0.0
    %1375 = vmatprep.subr.mxu0 0.0
    %1376 = vmatpush1.msra.mxu0 0.0
    %1377 = vmatprep.subr.mxu0 0.0
    %1378 = vmatpush1.msra.mxu0 0.0
    %1379 = vmatprep.subr.mxu0 0.0
    %1380 = vmatpush1.msra.mxu0 0.0
    %1381 = vmatprep.subr.mxu0 0.0
    %1382 = vmatpush1.msra.mxu0 0.0
    %1383 = vmatprep.subr.mxu0 0.0
    %1384 = vmatpush1.msra.mxu0 0.0
    %1385 = vmatprep.subr.mxu0 0.0
    %1386 = vmatpush1.msra.mxu0 0.0
    %1387 = vmatprep.subr.mxu0 0.0
    %1388 = vmatpush1.msra.mxu0 0.0
    %1389 = vmatprep.mubr.f32.mxu0 0.0
    %1390 = vmatmul.mubr.f32.gmra.mrb[0].mxu0 %v1320
    %v1391 = vpop.f32.mrb[0].mxu0
    %v1392 = vadd.f32 %v1317, %v1391
    %v1393 = vpop.f32.mrb[0].mxu0
    %1394 = vmatprep.mubr.f32.mxu0 0.0
    %1395 = vmatmul.mubr.f32.gmra.mrb[0].mxu0 %v1323
    %v1396 = vpop.f32.mrb[0].mxu0
    %v1397 = vadd.f32 %v1317, %v1396
    %v1398 = vpop.f32.mrb[0].mxu0
    %1399 = vdwg.mxu0
    %v1400 = vadd.f32 %v1392, %v1204
    %v1401 = vadd.f32 %v1397, %v1205
    %v1402 = vsel %vm151, %v1400, 0.0
    %1403 = vadd.xlane.f32.xlu0 %v1402
    %v1404 = vpop.xlane.xlu0 %1403
    %v1405 = vsel %vm151, %v1401, 0.0
    %1406 = vadd.xlane.f32.xlu0 %v1405
    %v1407 = vpop.xlane.xlu0 %1406
    %v1408 = vmul.f32 %v1404, %v1173
    %v1409 = vmul.f32 %v1407, %v1173
    %v1410 = vsub.f32 %v1400, %v1408
    %v1411 = vsub.f32 %v1401, %v1409
    %v1412 = vmul.f32 %v1410, %v1410
    %v1413 = vmul.f32 %v1411, %v1411
    %v1414 = vsel %vm151, %v1412, 0.0
    %1415 = vadd.xlane.f32.xlu0 %v1414
    %v1416 = vpop.xlane.xlu0 %1415
    %v1417 = vsel %vm151, %v1413, 0.0
    %1418 = vadd.xlane.f32.xlu0 %v1417
    %v1419 = vpop.xlane.xlu0 %1418
    %v1420 = vmul.f32 %v1416, %v1173
    %v1421 = vmul.f32 %v1419, %v1173
    %v1422 = vadd.f32 %v1420, 1e-12
    %v1423 = vadd.f32 %v1421, 1e-12
    %v1424 = vrsqrt.pop %v1422
    %v1425 = vrsqrt.pop %v1423
    %v1426 = vmul.f32 %v1410, %v1424
    %v1427 = vmul.f32 %v1411, %v1425
    %v1428 = vlaneseq
    %v1429 = vshrl.u32 %v1428, 7
    %v1430 = vsub.s32 5, %v1429
    %v1431 = vrot.slane %v118, %v1430
    %v1432 = vmul.f32 %v1426, %v1431
    %v1433 = vmul.f32 %v1427, %v1431
    %v1434 = vlaneseq
    %v1435 = vshrl.u32 %v1434, 7
    %v1436 = vsub.s32 6, %v1435
    %v1437 = vrot.slane %v118, %v1436
    %v1438 = vadd.f32 %v1432, %v1437
    %v1439 = vadd.f32 %v1433, %v1437
    %1440 = vst.msk [vmem:[#allocation11] sm:$0xff] %vm151, %v1438
    %1441 = vst.msk [vmem:[#allocation11 + $0x8] sm:$0xff] %vm151, %v1439
    // Predicated region
    $region74: #{tpu_custom_call.1} parent=1 // pred_check
      %p1442 = pneg %p107
    $region75: #{tpu_custom_call.1} parent=1 // pred_check_branch
      %1444 = sbr.rel (%p1442) target = $region77
    $region76: #{tpu_custom_call.1} parent=1 // pred_region
      %v1445 = vld [vmem:[%s11] sm:$0xff]
      %v1446 = vld [vmem:[#allocation10] sm:$0xff]
      %v1447 = vld [vmem:[#allocation10 + $0x8] sm:$0xff]
      %v1448 = vld [vmem:[#allocation10 + $0x10] sm:$0xff]
      %v1449 = vld [vmem:[#allocation10 + $0x18] sm:$0xff]
      %v1450 = vlaneseq
      %v1451 = vshrl.u32 %v1450, 7
      %v1452 = vsub.s32 0, %v1451
      %v1453 = vrot.slane %v1445, %v1452
      %v1455 = vsel %vm151, %v1438, 0
      %v1458 = vsel %vm151, %v1439, 0
      %1460 = vmatprep.subr.mxu0 0.0
      %1461 = vmatpush1.msra.mxu0 %v1446
      %1462 = vmatprep.subr.mxu0 0.0
      %1463 = vmatpush1.msra.mxu0 %v1447
      %1464 = vmatprep.subr.mxu0 0.0
      %1465 = vmatpush1.msra.mxu0 %v1448
      %1466 = vmatprep.subr.mxu0 0.0
      %1467 = vmatpush1.msra.mxu0 %v1449
      %1468 = vmatprep.subr.mxu0 0.0
      %1469 = vmatpush1.msra.mxu0 0.0
      %1470 = vmatprep.subr.mxu0 0.0
      %1471 = vmatpush1.msra.mxu0 0.0
      %1472 = vmatprep.subr.mxu0 0.0
      %1473 = vmatpush1.msra.mxu0 0.0
      %1474 = vmatprep.subr.mxu0 0.0
      %1475 = vmatpush1.msra.mxu0 0.0
      %1476 = vmatprep.subr.mxu0 0.0
      %1477 = vmatpush1.msra.mxu0 0.0
      %1478 = vmatprep.subr.mxu0 0.0
      %1479 = vmatpush1.msra.mxu0 0.0
      %1480 = vmatprep.subr.mxu0 0.0
      %1481 = vmatpush1.msra.mxu0 0.0
      %1482 = vmatprep.subr.mxu0 0.0
      %1483 = vmatpush1.msra.mxu0 0.0
      %1484 = vmatprep.subr.mxu0 0.0
      %1485 = vmatpush1.msra.mxu0 0.0
      %1486 = vmatprep.subr.mxu0 0.0
      %1487 = vmatpush1.msra.mxu0 0.0
      %1488 = vmatprep.subr.mxu0 0.0
      %1489 = vmatpush1.msra.mxu0 0.0
      %1490 = vmatprep.subr.mxu0 0.0
      %1491 = vmatpush1.msra.mxu0 0.0
      %1492 = vmatprep.subr.mxu0 0.0
      %1493 = vmatpush1.msra.mxu0 0.0
      %1494 = vmatprep.subr.mxu0 0.0
      %1495 = vmatpush1.msra.mxu0 0.0
      %1496 = vmatprep.subr.mxu0 0.0
      %1497 = vmatpush1.msra.mxu0 0.0
      %1498 = vmatprep.subr.mxu0 0.0
      %1499 = vmatpush1.msra.mxu0 0.0
      %1500 = vmatprep.subr.mxu0 0.0
      %1501 = vmatpush1.msra.mxu0 0.0
      %1502 = vmatprep.subr.mxu0 0.0
      %1503 = vmatpush1.msra.mxu0 0.0
      %1504 = vmatprep.subr.mxu0 0.0
      %1505 = vmatpush1.msra.mxu0 0.0
      %1506 = vmatprep.subr.mxu0 0.0
      %1507 = vmatpush1.msra.mxu0 0.0
      %1508 = vmatprep.subr.mxu0 0.0
      %1509 = vmatpush1.msra.mxu0 0.0
      %1510 = vmatprep.subr.mxu0 0.0
      %1511 = vmatpush1.msra.mxu0 0.0
      %1512 = vmatprep.subr.mxu0 0.0
      %1513 = vmatpush1.msra.mxu0 0.0
      %1514 = vmatprep.subr.mxu0 0.0
      %1515 = vmatpush1.msra.mxu0 0.0
      %1516 = vmatprep.subr.mxu0 0.0
      %1517 = vmatpush1.msra.mxu0 0.0
      %1518 = vmatprep.subr.mxu0 0.0
      %1519 = vmatpush1.msra.mxu0 0.0
      %1520 = vmatprep.subr.mxu0 0.0
      %1521 = vmatpush1.msra.mxu0 0.0
      %1522 = vmatprep.subr.mxu0 0.0
      %1523 = vmatpush1.msra.mxu0 0.0
      %1524 = vmatprep.mubr.f32.mxu0 0.0
      %1525 = vmatmul.mubr.f32.gmra.mrb[0].mxu0 %v1455
      %v1526 = vpop.f32.mrb[0].mxu0
      %v1527 = vadd.f32 %v1453, %v1526
      %v1528 = vpop.f32.mrb[0].mxu0
      %1529 = vmatprep.mubr.f32.mxu0 0.0
      %1530 = vmatmul.mubr.f32.gmra.mrb[0].mxu0 %v1458
      %v1531 = vpop.f32.mrb[0].mxu0
      %v1532 = vadd.f32 %v1453, %v1531
      %v1533 = vpop.f32.mrb[0].mxu0
      %1534 = vdwg.mxu0
      %v1535 = vmul.f32 %v1527, 0.5
      %v1536 = vmul.f32 %v1532, 0.5
      %v1537 = vmul.f32 %v1527, %v1297
      %v1538 = vmul.f32 %v1532, %v1297
      %v1539 = verf.f32.pop %v1537
      %v1540 = verf.f32.pop %v1538
      %v1541 = vadd.f32 %v1539, 1.0
      %v1542 = vadd.f32 %v1540, 1.0
      %v1543 = vmul.f32 %v1535, %v1541
      %v1544 = vmul.f32 %v1536, %v1542
      %1546 = vset.pattern.permute.xlu0 0
      %1547 = vperm.xlu0 %1546, %v1445
      %v1548 = vpop.permute.xlu0 %1547
      %v1549 = vrot.slane %v1445, 1
      %v1550 = vrot.slane %v1548, 2
      %v1552 = vsel %vm151, %v1549, 0
      %v1555 = vsel %vm151, %v1543, 0
      %v1558 = vsel %vm151, %v1544, 0
      %1560 = vmatprep.subr.mxu0 0.0
      %1561 = vmatpush1.xpose.msra.mxu0 %v1555
      %1562 = vmatprep.subr.mxu0 0.0
      %1563 = vmatpush1.xpose.msra.mxu0 %v1558
      %1564 = vmatprep.subr.mxu0 0.0
      %1565 = vmatpush1.xpose.msra.mxu0 0.0
      %1566 = vmatprep.subr.mxu0 0.0
      %1567 = vmatpush1.xpose.msra.mxu0 0.0
      %1568 = vmatprep.subr.mxu0 0.0
      %1569 = vmatpush1.xpose.msra.mxu0 0.0
      %1570 = vmatprep.subr.mxu0 0.0
      %1571 = vmatpush1.xpose.msra.mxu0 0.0
      %1572 = vmatprep.subr.mxu0 0.0
      %1573 = vmatpush1.xpose.msra.mxu0 0.0
      %1574 = vmatprep.subr.mxu0 0.0
      %1575 = vmatpush1.xpose.msra.mxu0 0.0
      %1576 = vmatprep.subr.mxu0 0.0
      %1577 = vmatpush1.xpose.msra.mxu0 0.0
      %1578 = vmatprep.subr.mxu0 0.0
      %1579 = vmatpush1.xpose.msra.mxu0 0.0
      %1580 = vmatprep.subr.mxu0 0.0
      %1581 = vmatpush1.xpose.msra.mxu0 0.0
      %1582 = vmatprep.subr.mxu0 0.0
      %1583 = vmatpush1.xpose.msra.mxu0 0.0
      %1584 = vmatprep.subr.mxu0 0.0
      %1585 = vmatpush1.xpose.msra.mxu0 0.0
      %1586 = vmatprep.subr.mxu0 0.0
      %1587 = vmatpush1.xpose.msra.mxu0 0.0
      %1588 = vmatprep.subr.mxu0 0.0
      %1589 = vmatpush1.xpose.msra.mxu0 0.0
      %1590 = vmatprep.subr.mxu0 0.0
      %1591 = vmatpush1.xpose.msra.mxu0 0.0
      %1592 = vmatprep.subr.mxu0 0.0
      %1593 = vmatpush1.xpose.msra.mxu0 0.0
      %1594 = vmatprep.subr.mxu0 0.0
      %1595 = vmatpush1.xpose.msra.mxu0 0.0
      %1596 = vmatprep.subr.mxu0 0.0
      %1597 = vmatpush1.xpose.msra.mxu0 0.0
      %1598 = vmatprep.subr.mxu0 0.0
      %1599 = vmatpush1.xpose.msra.mxu0 0.0
      %1600 = vmatprep.subr.mxu0 0.0
      %1601 = vmatpush1.xpose.msra.mxu0 0.0
      %1602 = vmatprep.subr.mxu0 0.0
      %1603 = vmatpush1.xpose.msra.mxu0 0.0
      %1604 = vmatprep.subr.mxu0 0.0
      %1605 = vmatpush1.xpose.msra.mxu0 0.0
      %1606 = vmatprep.subr.mxu0 0.0
      %1607 = vmatpush1.xpose.msra.mxu0 0.0
      %1608 = vmatprep.subr.mxu0 0.0
      %1609 = vmatpush1.xpose.msra.mxu0 0.0
      %1610 = vmatprep.subr.mxu0 0.0
      %1611 = vmatpush1.xpose.msra.mxu0 0.0
      %1612 = vmatprep.subr.mxu0 0.0
      %1613 = vmatpush1.xpose.msra.mxu0 0.0
      %1614 = vmatprep.subr.mxu0 0.0
      %1615 = vmatpush1.xpose.msra.mxu0 0.0
      %1616 = vmatprep.subr.mxu0 0.0
      %1617 = vmatpush1.xpose.msra.mxu0 0.0
      %1618 = vmatprep.subr.mxu0 0.0
      %1619 = vmatpush1.xpose.msra.mxu0 0.0
      %1620 = vmatprep.subr.mxu0 0.0
      %1621 = vmatpush1.xpose.msra.mxu0 0.0
      %1622 = vmatprep.subr.mxu0 0.0
      %1623 = vmatpush1.xpose.msra.mxu0 0.0
      %1624 = vmatprep.mubr.f32.mxu0 0.0
      %1625 = vmatmul.mubr.f32.gmra.mrb[0].mxu0 %v1552
      %v1626 = vpop.f32.mrb[0].mxu0
      %v1627 = vadd.f32 %v1550, %v1626
      %v1628 = vpop.f32.mrb[0].mxu0
      %1629 = vdwg.mxu0
      %v1630 = vsub.f32 0.0, %v1627
      %v1631 = vmul.f32 %v1630, 1.442695
      %v1632 = vpow.pop %v1631
      %v1633 = vadd.f32 %v1632, 1.0
      %v1634 = vrcp.pop %v1633
      %v1635 = vld [vmem:[#allocation5] sm:$0x1]
      %v1636 = vmul.f32 %v1634, %v1635
      %vm1637 = vcmask 122880
      %1638 = vst.msk [vmem:[#allocation12] sm:$0x1] %vm1637, %v1636
    $region77: #{tpu_custom_call.1} parent=1 // pred_fallthru
      _
    // Predicated region
    $region78: #{tpu_custom_call.1} parent=1 // pred_check
      _
    $region79: #{tpu_custom_call.1} parent=1 // pred_check_branch
      %1640 = sbr.rel (0) target = $region81
    $region80: #{tpu_custom_call.1} parent=1 // pred_region
      %s1642 = ssub.s32 256, 256
      %1643 = vsyncadd [#allocation4], %s1642
      %s1644 = sshll.u32 [#allocation11], 4
      %s1645 = int_to_ptr.vmem [resolvable:$true] %s1644
      %1650 = dma.vmem_to_hbm [thread:$0]  %s1645, 256, %s12, [#allocation4], 128, 128, 8
    $region81: #{tpu_custom_call.1} parent=1 // pred_fallthru
      _
    // Predicated region
    $region82: #{tpu_custom_call.1} parent=1 // pred_check
      _
    $region83: #{tpu_custom_call.1} parent=1 // pred_check_branch
      %1652 = sbr.rel (0) target = $region85
    $region84: #{tpu_custom_call.1} parent=1 // pred_region
      %s1654 = ssub.s32 16, 16
      %1655 = vsyncadd [#allocation13], %s1654
      %s1657 = sshll.u32 [#allocation12], 4
      %s1658 = int_to_ptr.vmem [resolvable:$true] %s1657
      %1660 = dma.vmem_to_hbm [thread:$0]  %s1658, 16, %s13, [#allocation13]
    $region85: #{tpu_custom_call.1} parent=1 // pred_fallthru
      _
    // Predicated region
    $region86: #{tpu_custom_call.1} parent=1 // pred_check
      _
    $region87: #{tpu_custom_call.1} parent=1 // pred_check_branch
      %1662 = sbr.rel (0) target = $region89
    $region88: #{tpu_custom_call.1} parent=1 // pred_region
      %1663 = dma.done [#allocation4], 256
    $region89: #{tpu_custom_call.1} parent=1 // pred_fallthru
      _
    // Predicated region
    $region90: #{tpu_custom_call.1} parent=1 // pred_check
      _
    $region91: #{tpu_custom_call.1} parent=1 // pred_check_branch
      %1665 = sbr.rel (0) target = $region93
    $region92: #{tpu_custom_call.1} parent=1 // pred_region
      %1666 = dma.done [#allocation13], 16
    $region93: #{tpu_custom_call.1} parent=1 // pred_fallthru
      _
    %1667 = vsyncpa [#allocation3], 1
    %1668 = vsyncpa [#allocation6], 1
    %1669 = vsyncpa [#allocation9], 1
    %1670 = vsyncpa [#allocation4], 1
    %1671 = vsyncpa [#allocation13], 1

</llo_original>
